<compile_context>
chip_gen: v5e
topology: v5e:2x2
jax: 0.10.0
libtpu: 0.0.40
codegen_flags: <defaults>
</compile_context>

<pallas_src>
import functools

import jax
import jax.numpy as jnp
from jax import lax
from jax.experimental import pallas as pl
from jax.experimental.pallas import tpu as pltpu

EPS = 1e-3


# --------------------------------------------------------------------------
# Fused kernel: 1x1 conv (MXU matmul) + batch stats + BN affine + ReLU.
# Each grid step handles one Cout block and the FULL (N*HW) spatial extent,
# so the batch statistics are exact within a single step.
# --------------------------------------------------------------------------
def fused_conv_bn_relu_kernel(x_ref, w_ref, gamma_ref, beta_ref, o_ref, *, inv_count):
    # x_ref:     (Cin, M)        f32  (M = N*HW; same block for every grid step)
    # w_ref:     (Cout_blk, Cin) bf16 (pre-cast in the wrapper)
    # gamma_ref: (Cout_blk, 1)   f32
    # beta_ref:  (Cout_blk, 1)   f32
    # o_ref:     (Cout_blk, M)   f32
    xb = x_ref[...].astype(jnp.bfloat16)                      # bf16 MXU operands
    y = jnp.dot(w_ref[...], xb, preferred_element_type=jnp.float32)  # (Cout_blk, M) f32

    # Per-channel batch statistics (biased variance, as PyTorch uses in the
    # training-mode forward normalization).
    mean = jnp.sum(y, axis=1, keepdims=True) * inv_count                  # (Cout_blk, 1)
    var = jnp.maximum(jnp.sum(y * y, axis=1, keepdims=True) * inv_count
                      - mean * mean, 0.0)

    scale = lax.rsqrt(var + EPS) * gamma_ref[...]   # gamma folded into scale
    shift = beta_ref[...] - mean * scale            # mean folded into shift

    o_ref[...] = jnp.maximum(y * scale + shift, 0.0).astype(o_ref.dtype)


def _default_cout_block(cout):
    """128-channel blocks only on 2-TensorCore chips (v7x); otherwise a single
    full-Cout grid step (v5e/v6e have one TC, the split is pure overhead)."""
    try:
        kind = jax.devices()[0].device_kind.lower()
    except Exception:
        kind = ""
    if "v7" in kind and cout % 128 == 0 and cout >= 256:
        return 128
    return cout


def conv_bn_relu(x_nchw, w_oihw, gamma, beta, *, cout_block=None):
    """x_nchw: (N, Cin, H, W) f32; w_oihw: (Cout, Cin, 1, 1); gamma/beta: (Cout,)."""
    n, cin, h, wd = x_nchw.shape
    cout = w_oihw.shape[0]
    hw = h * wd
    m = n * hw

    # Zero-copy for N == 1 (the module's case); general N falls back to a
    # one-time transpose so the kernel still sees a single (Cin, N*HW) slab.
    if n == 1:
        x2 = x_nchw.reshape(cin, hw)
    else:
        # TODO(synk): for large N*HW this single-block fused kernel should be
        # replaced by a spatially tiled two-pass variant; fine at small shapes.
        x2 = jnp.transpose(x_nchw, (1, 0, 2, 3)).reshape(cin, m)

    w2 = w_oihw.reshape(cout, cin).astype(jnp.bfloat16)      # bf16 weight for the MXU
    gamma2 = gamma.reshape(cout, 1).astype(jnp.float32)
    beta2 = beta.reshape(cout, 1).astype(jnp.float32)

    if cout_block is None:
        cout_block = _default_cout_block(cout)
    if cout % cout_block != 0:
        cout_block = cout
    n_co = cout // cout_block

    inv_count = 1.0 / float(m)

    out2 = pl.pallas_call(
        functools.partial(fused_conv_bn_relu_kernel, inv_count=inv_count),
        grid=(n_co,),
        in_specs=(
            pl.BlockSpec((cin, m), lambda co: (0, 0)),          # x resident across steps
            pl.BlockSpec((cout_block, cin), lambda co: (co, 0)),
            pl.BlockSpec((cout_block, 1), lambda co: (co, 0)),
            pl.BlockSpec((cout_block, 1), lambda co: (co, 0)),
        ),
        out_specs=pl.BlockSpec((cout_block, m), lambda co: (co, 0)),
        out_shape=jax.ShapeDtypeStruct((cout, m), jnp.float32),
        compiler_params=pltpu.CompilerParams(
            dimension_semantics=("parallel",)),
    )(x2, w2, gamma2, beta2)

    if n == 1:
        return out2.reshape(1, cout, h, wd)       # zero-copy, already NCHW
    return out2.reshape(cout, n, h, wd).transpose(1, 0, 2, 3)


def reference(x_nchw, w_oihw, gamma, beta, matmul_dtype=jnp.float32):
    """Pure-JAX reference of the PyTorch module's forward pass."""
    n, cin, h, wd = x_nchw.shape
    cout = w_oihw.shape[0]
    x3 = x_nchw.reshape(n, cin, h * wd).astype(matmul_dtype)
    w2 = w_oihw.reshape(cout, cin).astype(matmul_dtype)
    y = jnp.einsum("oc,bct->bot", w2, x3, preferred_element_type=jnp.float32)
    mean = jnp.mean(y, axis=(0, 2), keepdims=True)
    var = jnp.mean((y - mean) ** 2, axis=(0, 2), keepdims=True)
    yhat = (y - mean) / jnp.sqrt(var + EPS) * gamma.reshape(1, cout, 1) + beta.reshape(1, cout, 1)
    return jnp.maximum(yhat, 0.0).reshape(n, cout, h, wd)


if __name__ == "__main__":
    # Shapes fixed by the module: Conv2d(528 -> 256, 1x1), input x145 = (1, 528, 14, 14).
    N, CIN, H, W = 1, 528, 14, 14
    COUT = 256

    key = jax.random.PRNGKey(0)
    kx, kw, kg, kb = jax.random.split(key, 4)
    x = jax.random.normal(kx, (N, CIN, H, W), dtype=jnp.float32)
    w = jax.random.normal(kw, (COUT, CIN, 1, 1), dtype=jnp.float32) * (1.0 / (CIN ** 0.5))
    gamma = 1.0 + 0.1 * jax.random.normal(kg, (COUT,), dtype=jnp.float32)
    beta = 0.1 * jax.random.normal(kb, (COUT,), dtype=jnp.float32)

    ref_bf16 = reference(x, w, gamma, beta, matmul_dtype=jnp.bfloat16)
    ref_f32 = reference(x, w, gamma, beta, matmul_dtype=jnp.float32)

    # Default (hardware-selected) Cout blocking.
    out = conv_bn_relu(x, w, gamma, beta)
    jax.block_until_ready(out)
    assert out.shape == (N, COUT, H, W), out.shape

    # Structural check: reference using the same bf16 matmul precision.
    err_bf16 = float(jnp.max(jnp.abs(out - ref_bf16)))
    assert jnp.allclose(out, ref_bf16, atol=1e-3, rtol=1e-3), err_bf16

    # Precision check vs. the full-f32 reference (bf16 MXU operands, f32 accum;
    # BatchNorm renormalizes, so the deviation stays small).
    err_f32 = float(jnp.max(jnp.abs(out - ref_f32)))
    assert jnp.allclose(out, ref_f32, atol=3e-2, rtol=3e-2), err_f32

    # Also exercise the 2-block (v7x-style, 2x128 channel) grid path.
    out128 = conv_bn_relu(x, w, gamma, beta, cout_block=128)
    jax.block_until_ready(out128)
    err_128 = float(jnp.max(jnp.abs(out128 - ref_bf16)))
    assert jnp.allclose(out128, ref_bf16, atol=1e-3, rtol=1e-3), err_128

    print("KERNEL_OK")
</pallas_src>

<mosaic_0001>
module attributes {stable_mosaic.version = 11 : i64} {
  func.func @fused_conv_bn_relu_kernel(%arg0: i32, %arg1: memref<528x196xf32, #tpu.memory_space<vmem>>, %arg2: memref<256x528xbf16, #tpu.memory_space<vmem>>, %arg3: memref<256x1xf32, #tpu.memory_space<vmem>>, %arg4: memref<256x1xf32, #tpu.memory_space<vmem>>, %arg5: memref<256x196xf32, #tpu.memory_space<vmem>>) attributes {dimension_semantics = [#tpu.dimension_semantics<parallel>], iteration_bounds = array<i64: 1>, scalar_prefetch = 0 : i64, scratch_operands = 0 : i64, tpu.core_type = #tpu.core_type<tc>, window_params = [{pipeline_mode = #tpu.pipeline_mode<synchronous>, transform_indices = @transform_0, window_bounds = array<i64: 528, 196>}, {transform_indices = @transform_1, window_bounds = array<i64: 256, 528>}, {transform_indices = @transform_2, window_bounds = array<i64: 256, 1>}, {transform_indices = @transform_3, window_bounds = array<i64: 256, 1>}, {transform_indices = @transform_4, window_bounds = array<i64: 256, 196>}]} {
    %c0 = arith.constant 0 : index
    %c0_0 = arith.constant 0 : index
    %0 = vector.load %arg1[%c0, %c0_0] : memref<528x196xf32, #tpu.memory_space<vmem>>, vector<528x196xf32>
    %1 = arith.truncf %0 : vector<528x196xf32> to vector<528x196xbf16>
    %c0_1 = arith.constant 0 : index
    %c0_2 = arith.constant 0 : index
    %2 = vector.load %arg2[%c0_1, %c0_2] : memref<256x528xbf16, #tpu.memory_space<vmem>>, vector<256x528xbf16>
    %cst = arith.constant dense<0.000000e+00> : vector<256x196xf32>
    %3 = tpu.matmul %2, %1, %cst {dimension_numbers = #tpu.dot_dimension_numbers<[1], [0], [0], [1], [0, 0, 1, 1], [], []>} : vector<256x528xbf16>, vector<528x196xbf16>, vector<256x196xf32> -> vector<256x196xf32>
    %cst_3 = arith.constant dense<0.000000e+00> : vector<256xf32>
    %4 = vector.multi_reduction <add>, %3, %cst_3 [1] : vector<256x196xf32> to vector<256xf32>
    %5 = vector.shape_cast %4 : vector<256xf32> to vector<256x1xf32>
    %cst_4 = arith.constant 0.00510204071 : f32
    %6 = vector.broadcast %cst_4 : f32 to vector<256x1xf32>
    %7 = arith.mulf %5, %6 : vector<256x1xf32>
    %8 = arith.mulf %3, %3 : vector<256x196xf32>
    %cst_5 = arith.constant dense<0.000000e+00> : vector<256xf32>
    %9 = vector.multi_reduction <add>, %8, %cst_5 [1] : vector<256x196xf32> to vector<256xf32>
    %10 = vector.shape_cast %9 : vector<256xf32> to vector<256x1xf32>
    %cst_6 = arith.constant 0.00510204071 : f32
    %11 = vector.broadcast %cst_6 : f32 to vector<256x1xf32>
    %12 = arith.mulf %10, %11 : vector<256x1xf32>
    %13 = arith.mulf %7, %7 : vector<256x1xf32>
    %14 = arith.subf %12, %13 : vector<256x1xf32>
    %cst_7 = arith.constant 0.000000e+00 : f32
    %15 = vector.broadcast %cst_7 : f32 to vector<256x1xf32>
    %16 = arith.maximumf %14, %15 : vector<256x1xf32>
    %cst_8 = arith.constant 1.000000e-03 : f32
    %17 = vector.broadcast %cst_8 : f32 to vector<256x1xf32>
    %18 = arith.addf %16, %17 : vector<256x1xf32>
    %19 = math.rsqrt %18 : vector<256x1xf32>
    %c0_9 = arith.constant 0 : index
    %c0_10 = arith.constant 0 : index
    %20 = vector.load %arg3[%c0_9, %c0_10] : memref<256x1xf32, #tpu.memory_space<vmem>>, vector<256x1xf32>
    %21 = arith.mulf %19, %20 : vector<256x1xf32>
    %c0_11 = arith.constant 0 : index
    %c0_12 = arith.constant 0 : index
    %22 = vector.load %arg4[%c0_11, %c0_12] : memref<256x1xf32, #tpu.memory_space<vmem>>, vector<256x1xf32>
    %23 = arith.mulf %7, %21 : vector<256x1xf32>
    %24 = arith.subf %22, %23 : vector<256x1xf32>
    %25 = vector.broadcast %21 : vector<256x1xf32> to vector<256x196xf32>
    %26 = arith.mulf %3, %25 : vector<256x196xf32>
    %27 = vector.broadcast %24 : vector<256x1xf32> to vector<256x196xf32>
    %28 = arith.addf %26, %27 : vector<256x196xf32>
    %cst_13 = arith.constant 0.000000e+00 : f32
    %29 = vector.broadcast %cst_13 : f32 to vector<256x196xf32>
    %30 = arith.maximumf %28, %29 : vector<256x196xf32>
    %c0_14 = arith.constant 0 : index
    %c0_15 = arith.constant 0 : index
    %31 = vector.load %arg5[%c0_14, %c0_15] : memref<256x196xf32, #tpu.memory_space<vmem>>, vector<256x196xf32>
    tpu.vector_store %arg5[%c0_14, %c0_15], %30 {strides = array<i32>} : memref<256x196xf32, #tpu.memory_space<vmem>>, vector<256x196xf32>,
    return
  }
  func.func @transform_0(%arg0: i32) -> (i32, i32) {
    %c0_i32 = arith.constant 0 : i32
    %c0_i32_0 = arith.constant 0 : i32
    %c0_i32_1 = arith.constant 0 : i32
    return %c0_i32, %c0_i32_0 : i32, i32
  }
  func.func @transform_1(%arg0: i32) -> (i32, i32) {
    %c0_i32 = arith.constant 0 : i32
    %c0_i32_0 = arith.constant 0 : i32
    return %arg0, %c0_i32 : i32, i32
  }
  func.func @transform_2(%arg0: i32) -> (i32, i32) {
    %c0_i32 = arith.constant 0 : i32
    %c0_i32_0 = arith.constant 0 : i32
    return %arg0, %c0_i32 : i32, i32
  }
  func.func @transform_3(%arg0: i32) -> (i32, i32) {
    %c0_i32 = arith.constant 0 : i32
    %c0_i32_0 = arith.constant 0 : i32
    return %arg0, %c0_i32 : i32, i32
  }
  func.func @transform_4(%arg0: i32) -> (i32, i32) {
    %c0_i32 = arith.constant 0 : i32
    %c0_i32_0 = arith.constant 0 : i32
    return %arg0, %c0_i32 : i32, i32
  }
}

</mosaic_0001>

<llo_original>
// kernel: tpu_custom_call.1
$region0: #{tpu_custom_call.1}
  #allocation0 [shape = 'u32[]', space=smem, size = 0x4, offset = 0x4, fixed_abs, tag = 'smem constant byte address 0x4 - core index']
  #allocation1 [shape = 'u32[72,128]{1,0:T(1,128)}', space=vmem, size = 0x9000, scoped, tag = 'internal scratch']
  %s0 = inlined_call_operand.vmem [shape: f32[528,196], index: 0, kind: input, shape index: {}]
  %s1 = inlined_call_operand.vmem [shape: bf16[256,528], index: 1, kind: input, shape index: {}]
  %s2 = inlined_call_operand.vmem [shape: f32[256,1], index: 2, kind: input, shape index: {}]
  %s3 = inlined_call_operand.vmem [shape: f32[256,1], index: 3, kind: input, shape index: {}]
  %s4 = inlined_call_operand.vmem [shape: f32[256,196], index: 4, kind: output, shape index: {}]
  %s5 = sld [smem:[#allocation0]]
  $region26: #{tpu_custom_call.1} parent=0
    _
  %s7 = ssub.s32 1, %s5
  %s8 = scalar_select 0, %s7, %s5
  // Predicated region
  $region2: #{tpu_custom_call.1} parent=0 // pred_check
    _
  $region3: #{tpu_custom_call.1} parent=0 // pred_check_branch
    %10 = sbr.rel (0) target = $region5
  $region4: #{tpu_custom_call.1} parent=0 // pred_region
    _
  $region5: #{tpu_custom_call.1} parent=0 // pred_fallthru
    _
  // Predicated region
  $region6: #{tpu_custom_call.1} parent=0 // pred_check
    _
  $region7: #{tpu_custom_call.1} parent=0 // pred_check_branch
    %12 = sbr.rel (0) target = $region9
  $region8: #{tpu_custom_call.1} parent=0 // pred_region
    _
  $region9: #{tpu_custom_call.1} parent=0 // pred_fallthru
    _
  // Predicated region
  $region10: #{tpu_custom_call.1} parent=0 // pred_check
    _
  $region11: #{tpu_custom_call.1} parent=0 // pred_check_branch
    %14 = sbr.rel (0) target = $region13
  $region12: #{tpu_custom_call.1} parent=0 // pred_region
    _
  $region13: #{tpu_custom_call.1} parent=0 // pred_fallthru
    _
  // Predicated region
  $region14: #{tpu_custom_call.1} parent=0 // pred_check
    _
  $region15: #{tpu_custom_call.1} parent=0 // pred_check_branch
    %16 = sbr.rel (0) target = $region17
  $region16: #{tpu_custom_call.1} parent=0 // pred_region
    _
  $region17: #{tpu_custom_call.1} parent=0 // pred_fallthru
    _
  %v18 = vld [vmem:[%s0] sm:$0xff]
  %v19 = vld [vmem:[%s0 + $0x8] sm:$0xff]
  %v20 = vld [vmem:[%s0 + $0x10] sm:$0xff]
  %v21 = vld [vmem:[%s0 + $0x18] sm:$0xff]
  %v22 = vld [vmem:[%s0 + $0x20] sm:$0xff]
  %v23 = vld [vmem:[%s0 + $0x28] sm:$0xff]
  %v24 = vld [vmem:[%s0 + $0x30] sm:$0xff]
  %v25 = vld [vmem:[%s0 + $0x38] sm:$0xff]
  %v26 = vld [vmem:[%s0 + $0x40] sm:$0xff]
  %v27 = vld [vmem:[%s0 + $0x48] sm:$0xff]
  %v28 = vld [vmem:[%s0 + $0x50] sm:$0xff]
  %v29 = vld [vmem:[%s0 + $0x58] sm:$0xff]
  %v30 = vld [vmem:[%s0 + $0x60] sm:$0xff]
  %v31 = vld [vmem:[%s0 + $0x68] sm:$0xff]
  %v32 = vld [vmem:[%s0 + $0x70] sm:$0xff]
  %v33 = vld [vmem:[%s0 + $0x78] sm:$0xff]
  %v34 = vld [vmem:[%s0 + $0x80] sm:$0xff]
  %v35 = vld [vmem:[%s0 + $0x88] sm:$0xff]
  %v36 = vld [vmem:[%s0 + $0x90] sm:$0xff]
  %v37 = vld [vmem:[%s0 + $0x98] sm:$0xff]
  %v38 = vld [vmem:[%s0 + $0xa0] sm:$0xff]
  %v39 = vld [vmem:[%s0 + $0xa8] sm:$0xff]
  %v40 = vld [vmem:[%s0 + $0xb0] sm:$0xff]
  %v41 = vld [vmem:[%s0 + $0xb8] sm:$0xff]
  %v42 = vld [vmem:[%s0 + $0xc0] sm:$0xff]
  %v43 = vld [vmem:[%s0 + $0xc8] sm:$0xff]
  %v44 = vld [vmem:[%s0 + $0xd0] sm:$0xff]
  %v45 = vld [vmem:[%s0 + $0xd8] sm:$0xff]
  %v46 = vld [vmem:[%s0 + $0xe0] sm:$0xff]
  %v47 = vld [vmem:[%s0 + $0xe8] sm:$0xff]
  %v48 = vld [vmem:[%s0 + $0xf0] sm:$0xff]
  %v49 = vld [vmem:[%s0 + $0xf8] sm:$0xff]
  %v50 = vld [vmem:[%s0 + $0x100] sm:$0xff]
  %v51 = vld [vmem:[%s0 + $0x108] sm:$0xff]
  %v52 = vld [vmem:[%s0 + $0x110] sm:$0xff]
  %v53 = vld [vmem:[%s0 + $0x118] sm:$0xff]
  %v54 = vld [vmem:[%s0 + $0x120] sm:$0xff]
  %v55 = vld [vmem:[%s0 + $0x128] sm:$0xff]
  %v56 = vld [vmem:[%s0 + $0x130] sm:$0xff]
  %v57 = vld [vmem:[%s0 + $0x138] sm:$0xff]
  %v58 = vld [vmem:[%s0 + $0x140] sm:$0xff]
  %v59 = vld [vmem:[%s0 + $0x148] sm:$0xff]
  %v60 = vld [vmem:[%s0 + $0x150] sm:$0xff]
  %v61 = vld [vmem:[%s0 + $0x158] sm:$0xff]
  %v62 = vld [vmem:[%s0 + $0x160] sm:$0xff]
  %v63 = vld [vmem:[%s0 + $0x168] sm:$0xff]
  %v64 = vld [vmem:[%s0 + $0x170] sm:$0xff]
  %v65 = vld [vmem:[%s0 + $0x178] sm:$0xff]
  %v66 = vld [vmem:[%s0 + $0x180] sm:$0xff]
  %v67 = vld [vmem:[%s0 + $0x188] sm:$0xff]
  %v68 = vld [vmem:[%s0 + $0x190] sm:$0xff]
  %v69 = vld [vmem:[%s0 + $0x198] sm:$0xff]
  %v70 = vld [vmem:[%s0 + $0x1a0] sm:$0xff]
  %v71 = vld [vmem:[%s0 + $0x1a8] sm:$0xff]
  %v72 = vld [vmem:[%s0 + $0x1b0] sm:$0xff]
  %v73 = vld [vmem:[%s0 + $0x1b8] sm:$0xff]
  %v74 = vld [vmem:[%s0 + $0x1c0] sm:$0xff]
  %v75 = vld [vmem:[%s0 + $0x1c8] sm:$0xff]
  %v76 = vld [vmem:[%s0 + $0x1d0] sm:$0xff]
  %v77 = vld [vmem:[%s0 + $0x1d8] sm:$0xff]
  %v78 = vld [vmem:[%s0 + $0x1e0] sm:$0xff]
  %v79 = vld [vmem:[%s0 + $0x1e8] sm:$0xff]
  %v80 = vld [vmem:[%s0 + $0x1f0] sm:$0xff]
  %v81 = vld [vmem:[%s0 + $0x1f8] sm:$0xff]
  %v82 = vld [vmem:[%s0 + $0x200] sm:$0xff]
  %v83 = vld [vmem:[%s0 + $0x208] sm:$0xff]
  %v84 = vld [vmem:[%s0 + $0x210] sm:$0xff]
  %v85 = vld [vmem:[%s0 + $0x218] sm:$0xff]
  %v86 = vld [vmem:[%s0 + $0x220] sm:$0xff]
  %v87 = vld [vmem:[%s0 + $0x228] sm:$0xff]
  %v88 = vld [vmem:[%s0 + $0x230] sm:$0xff]
  %v89 = vld [vmem:[%s0 + $0x238] sm:$0xff]
  %v90 = vld [vmem:[%s0 + $0x240] sm:$0xff]
  %v91 = vld [vmem:[%s0 + $0x248] sm:$0xff]
  %v92 = vld [vmem:[%s0 + $0x250] sm:$0xff]
  %v93 = vld [vmem:[%s0 + $0x258] sm:$0xff]
  %v94 = vld [vmem:[%s0 + $0x260] sm:$0xff]
  %v95 = vld [vmem:[%s0 + $0x268] sm:$0xff]
  %v96 = vld [vmem:[%s0 + $0x270] sm:$0xff]
  %v97 = vld [vmem:[%s0 + $0x278] sm:$0xff]
  %v98 = vld [vmem:[%s0 + $0x280] sm:$0xff]
  %v99 = vld [vmem:[%s0 + $0x288] sm:$0xff]
  %v100 = vld [vmem:[%s0 + $0x290] sm:$0xff]
  %v101 = vld [vmem:[%s0 + $0x298] sm:$0xff]
  %v102 = vld [vmem:[%s0 + $0x2a0] sm:$0xff]
  %v103 = vld [vmem:[%s0 + $0x2a8] sm:$0xff]
  %v104 = vld [vmem:[%s0 + $0x2b0] sm:$0xff]
  %v105 = vld [vmem:[%s0 + $0x2b8] sm:$0xff]
  %v106 = vld [vmem:[%s0 + $0x2c0] sm:$0xff]
  %v107 = vld [vmem:[%s0 + $0x2c8] sm:$0xff]
  %v108 = vld [vmem:[%s0 + $0x2d0] sm:$0xff]
  %v109 = vld [vmem:[%s0 + $0x2d8] sm:$0xff]
  %v110 = vld [vmem:[%s0 + $0x2e0] sm:$0xff]
  %v111 = vld [vmem:[%s0 + $0x2e8] sm:$0xff]
  %v112 = vld [vmem:[%s0 + $0x2f0] sm:$0xff]
  %v113 = vld [vmem:[%s0 + $0x2f8] sm:$0xff]
  %v114 = vld [vmem:[%s0 + $0x300] sm:$0xff]
  %v115 = vld [vmem:[%s0 + $0x308] sm:$0xff]
  %v116 = vld [vmem:[%s0 + $0x310] sm:$0xff]
  %v117 = vld [vmem:[%s0 + $0x318] sm:$0xff]
  %v118 = vld [vmem:[%s0 + $0x320] sm:$0xff]
  %v119 = vld [vmem:[%s0 + $0x328] sm:$0xff]
  %v120 = vld [vmem:[%s0 + $0x330] sm:$0xff]
  %v121 = vld [vmem:[%s0 + $0x338] sm:$0xff]
  %v122 = vld [vmem:[%s0 + $0x340] sm:$0xff]
  %v123 = vld [vmem:[%s0 + $0x348] sm:$0xff]
  %v124 = vld [vmem:[%s0 + $0x350] sm:$0xff]
  %v125 = vld [vmem:[%s0 + $0x358] sm:$0xff]
  %v126 = vld [vmem:[%s0 + $0x360] sm:$0xff]
  %v127 = vld [vmem:[%s0 + $0x368] sm:$0xff]
  %v128 = vld [vmem:[%s0 + $0x370] sm:$0xff]
  %v129 = vld [vmem:[%s0 + $0x378] sm:$0xff]
  %v130 = vld [vmem:[%s0 + $0x380] sm:$0xff]
  %v131 = vld [vmem:[%s0 + $0x388] sm:$0xff]
  %v132 = vld [vmem:[%s0 + $0x390] sm:$0xff]
  %v133 = vld [vmem:[%s0 + $0x398] sm:$0xff]
  %v134 = vld [vmem:[%s0 + $0x3a0] sm:$0xff]
  %v135 = vld [vmem:[%s0 + $0x3a8] sm:$0xff]
  %v136 = vld [vmem:[%s0 + $0x3b0] sm:$0xff]
  %v137 = vld [vmem:[%s0 + $0x3b8] sm:$0xff]
  %v138 = vld [vmem:[%s0 + $0x3c0] sm:$0xff]
  %v139 = vld [vmem:[%s0 + $0x3c8] sm:$0xff]
  %v140 = vld [vmem:[%s0 + $0x3d0] sm:$0xff]
  %v141 = vld [vmem:[%s0 + $0x3d8] sm:$0xff]
  %v142 = vld [vmem:[%s0 + $0x3e0] sm:$0xff]
  %v143 = vld [vmem:[%s0 + $0x3e8] sm:$0xff]
  %v144 = vld [vmem:[%s0 + $0x3f0] sm:$0xff]
  %v145 = vld [vmem:[%s0 + $0x3f8] sm:$0xff]
  %v146 = vld [vmem:[%s0 + $0x400] sm:$0xff]
  %v147 = vld [vmem:[%s0 + $0x408] sm:$0xff]
  %v148 = vld [vmem:[%s0 + $0x410] sm:$0xff]
  %v149 = vld [vmem:[%s0 + $0x418] sm:$0xff]
  %v150 = vpack.c.bf16 %v20, %v18
  %v151 = vpack.c.bf16 %v21, %v19
  %v152 = vpack.c.bf16 %v24, %v22
  %v153 = vpack.c.bf16 %v25, %v23
  %v154 = vpack.c.bf16 %v28, %v26
  %v155 = vpack.c.bf16 %v29, %v27
  %v156 = vpack.c.bf16 %v32, %v30
  %v157 = vpack.c.bf16 %v33, %v31
  %v158 = vpack.c.bf16 %v36, %v34
  %v159 = vpack.c.bf16 %v37, %v35
  %v160 = vpack.c.bf16 %v40, %v38
  %v161 = vpack.c.bf16 %v41, %v39
  %v162 = vpack.c.bf16 %v44, %v42
  %v163 = vpack.c.bf16 %v45, %v43
  %v164 = vpack.c.bf16 %v48, %v46
  %v165 = vpack.c.bf16 %v49, %v47
  %v166 = vpack.c.bf16 %v52, %v50
  %v167 = vpack.c.bf16 %v53, %v51
  %v168 = vpack.c.bf16 %v56, %v54
  %v169 = vpack.c.bf16 %v57, %v55
  %v170 = vpack.c.bf16 %v60, %v58
  %v171 = vpack.c.bf16 %v61, %v59
  %v172 = vpack.c.bf16 %v64, %v62
  %v173 = vpack.c.bf16 %v65, %v63
  %v174 = vpack.c.bf16 %v68, %v66
  %v175 = vpack.c.bf16 %v69, %v67
  %v176 = vpack.c.bf16 %v72, %v70
  %v177 = vpack.c.bf16 %v73, %v71
  %v178 = vpack.c.bf16 %v76, %v74
  %v179 = vpack.c.bf16 %v77, %v75
  %v180 = vpack.c.bf16 %v80, %v78
  %v181 = vpack.c.bf16 %v81, %v79
  %v182 = vpack.c.bf16 %v84, %v82
  %v183 = vpack.c.bf16 %v85, %v83
  %v184 = vpack.c.bf16 %v88, %v86
  %v185 = vpack.c.bf16 %v89, %v87
  %v186 = vpack.c.bf16 %v92, %v90
  %v187 = vpack.c.bf16 %v93, %v91
  %v188 = vpack.c.bf16 %v96, %v94
  %v189 = vpack.c.bf16 %v97, %v95
  %v190 = vpack.c.bf16 %v100, %v98
  %v191 = vpack.c.bf16 %v101, %v99
  %v192 = vpack.c.bf16 %v104, %v102
  %v193 = vpack.c.bf16 %v105, %v103
  %v194 = vpack.c.bf16 %v108, %v106
  %v195 = vpack.c.bf16 %v109, %v107
  %v196 = vpack.c.bf16 %v112, %v110
  %v197 = vpack.c.bf16 %v113, %v111
  %v198 = vpack.c.bf16 %v116, %v114
  %v199 = vpack.c.bf16 %v117, %v115
  %v200 = vpack.c.bf16 %v120, %v118
  %v201 = vpack.c.bf16 %v121, %v119
  %v202 = vpack.c.bf16 %v124, %v122
  %v203 = vpack.c.bf16 %v125, %v123
  %v204 = vpack.c.bf16 %v128, %v126
  %v205 = vpack.c.bf16 %v129, %v127
  %v206 = vpack.c.bf16 %v132, %v130
  %v207 = vpack.c.bf16 %v133, %v131
  %v208 = vpack.c.bf16 %v136, %v134
  %v209 = vpack.c.bf16 %v137, %v135
  %v210 = vpack.c.bf16 %v140, %v138
  %v211 = vpack.c.bf16 %v141, %v139
  %v212 = vpack.c.bf16 %v144, %v142
  %v213 = vpack.c.bf16 %v145, %v143
  %v214 = vpack.c.bf16 %v148, %v146
  %v215 = vpack.c.bf16 %v149, %v147
  %v216 = vld [vmem:[%s1] sm:$0xff]
  %v217 = vld [vmem:[%s1 + $0x8] sm:$0xff]
  %v218 = vld [vmem:[%s1 + $0x10] sm:$0xf]
  %v219 = vld [vmem:[%s1 + $0x14] sm:$0xff]
  %v220 = vld [vmem:[%s1 + $0x1c] sm:$0xff]
  %v221 = vld [vmem:[%s1 + $0x24] sm:$0xf]
  %v222 = vld [vmem:[%s1 + $0x28] sm:$0xff]
  %v223 = vld [vmem:[%s1 + $0x30] sm:$0xff]
  %v224 = vld [vmem:[%s1 + $0x38] sm:$0xf]
  %v225 = vld [vmem:[%s1 + $0x3c] sm:$0xff]
  %v226 = vld [vmem:[%s1 + $0x44] sm:$0xff]
  %v227 = vld [vmem:[%s1 + $0x4c] sm:$0xf]
  %v228 = vld [vmem:[%s1 + $0x50] sm:$0xff]
  %v229 = vld [vmem:[%s1 + $0x58] sm:$0xff]
  %v230 = vld [vmem:[%s1 + $0x60] sm:$0xf]
  %v231 = vld [vmem:[%s1 + $0x64] sm:$0xff]
  %v232 = vld [vmem:[%s1 + $0x6c] sm:$0xff]
  %v233 = vld [vmem:[%s1 + $0x74] sm:$0xf]
  %v234 = vld [vmem:[%s1 + $0x78] sm:$0xff]
  %v235 = vld [vmem:[%s1 + $0x80] sm:$0xff]
  %v236 = vld [vmem:[%s1 + $0x88] sm:$0xf]
  %v237 = vld [vmem:[%s1 + $0x8c] sm:$0xff]
  %v238 = vld [vmem:[%s1 + $0x94] sm:$0xff]
  %v239 = vld [vmem:[%s1 + $0x9c] sm:$0xf]
  %v240 = vld [vmem:[%s1 + $0xa0] sm:$0xff]
  %v241 = vld [vmem:[%s1 + $0xa8] sm:$0xff]
  %v242 = vld [vmem:[%s1 + $0xb0] sm:$0xf]
  %v243 = vld [vmem:[%s1 + $0xb4] sm:$0xff]
  %v244 = vld [vmem:[%s1 + $0xbc] sm:$0xff]
  %v245 = vld [vmem:[%s1 + $0xc4] sm:$0xf]
  %v246 = vld [vmem:[%s1 + $0xc8] sm:$0xff]
  %v247 = vld [vmem:[%s1 + $0xd0] sm:$0xff]
  %v248 = vld [vmem:[%s1 + $0xd8] sm:$0xf]
  %v249 = vld [vmem:[%s1 + $0xdc] sm:$0xff]
  %v250 = vld [vmem:[%s1 + $0xe4] sm:$0xff]
  %v251 = vld [vmem:[%s1 + $0xec] sm:$0xf]
  %v252 = vld [vmem:[%s1 + $0xf0] sm:$0xff]
  %v253 = vld [vmem:[%s1 + $0xf8] sm:$0xff]
  %v254 = vld [vmem:[%s1 + $0x100] sm:$0xf]
  %v255 = vld [vmem:[%s1 + $0x104] sm:$0xff]
  %v256 = vld [vmem:[%s1 + $0x10c] sm:$0xff]
  %v257 = vld [vmem:[%s1 + $0x114] sm:$0xf]
  %v258 = vld [vmem:[%s1 + $0x118] sm:$0xff]
  %v259 = vld [vmem:[%s1 + $0x120] sm:$0xff]
  %v260 = vld [vmem:[%s1 + $0x128] sm:$0xf]
  %v261 = vld [vmem:[%s1 + $0x12c] sm:$0xff]
  %v262 = vld [vmem:[%s1 + $0x134] sm:$0xff]
  %v263 = vld [vmem:[%s1 + $0x13c] sm:$0xf]
  %v264 = vld [vmem:[%s1 + $0x140] sm:$0xff]
  %v265 = vld [vmem:[%s1 + $0x148] sm:$0xff]
  %v266 = vld [vmem:[%s1 + $0x150] sm:$0xf]
  %v267 = vld [vmem:[%s1 + $0x154] sm:$0xff]
  %v268 = vld [vmem:[%s1 + $0x15c] sm:$0xff]
  %v269 = vld [vmem:[%s1 + $0x164] sm:$0xf]
  %v270 = vld [vmem:[%s1 + $0x168] sm:$0xff]
  %v271 = vld [vmem:[%s1 + $0x170] sm:$0xff]
  %v272 = vld [vmem:[%s1 + $0x178] sm:$0xf]
  %v273 = vld [vmem:[%s1 + $0x17c] sm:$0xff]
  %v274 = vld [vmem:[%s1 + $0x184] sm:$0xff]
  %v275 = vld [vmem:[%s1 + $0x18c] sm:$0xf]
  %v276 = vld [vmem:[%s1 + $0x190] sm:$0xff]
  %v277 = vld [vmem:[%s1 + $0x198] sm:$0xff]
  %v278 = vld [vmem:[%s1 + $0x1a0] sm:$0xf]
  %v279 = vld [vmem:[%s1 + $0x1a4] sm:$0xff]
  %v280 = vld [vmem:[%s1 + $0x1ac] sm:$0xff]
  %v281 = vld [vmem:[%s1 + $0x1b4] sm:$0xf]
  %v282 = vld [vmem:[%s1 + $0x1b8] sm:$0xff]
  %v283 = vld [vmem:[%s1 + $0x1c0] sm:$0xff]
  %v284 = vld [vmem:[%s1 + $0x1c8] sm:$0xf]
  %v285 = vld [vmem:[%s1 + $0x1cc] sm:$0xff]
  %v286 = vld [vmem:[%s1 + $0x1d4] sm:$0xff]
  %v287 = vld [vmem:[%s1 + $0x1dc] sm:$0xf]
  %v288 = vld [vmem:[%s1 + $0x1e0] sm:$0xff]
  %v289 = vld [vmem:[%s1 + $0x1e8] sm:$0xff]
  %v290 = vld [vmem:[%s1 + $0x1f0] sm:$0xf]
  %v291 = vld [vmem:[%s1 + $0x1f4] sm:$0xff]
  %v292 = vld [vmem:[%s1 + $0x1fc] sm:$0xff]
  %v293 = vld [vmem:[%s1 + $0x204] sm:$0xf]
  %v294 = vld [vmem:[%s1 + $0x208] sm:$0xff]
  %v295 = vld [vmem:[%s1 + $0x210] sm:$0xff]
  %v296 = vld [vmem:[%s1 + $0x218] sm:$0xf]
  %v297 = vld [vmem:[%s1 + $0x21c] sm:$0xff]
  %v298 = vld [vmem:[%s1 + $0x224] sm:$0xff]
  %v299 = vld [vmem:[%s1 + $0x22c] sm:$0xf]
  %v300 = vld [vmem:[%s1 + $0x230] sm:$0xff]
  %v301 = vld [vmem:[%s1 + $0x238] sm:$0xff]
  %v302 = vld [vmem:[%s1 + $0x240] sm:$0xf]
  %v303 = vld [vmem:[%s1 + $0x244] sm:$0xff]
  %v304 = vld [vmem:[%s1 + $0x24c] sm:$0xff]
  %v305 = vld [vmem:[%s1 + $0x254] sm:$0xf]
  %v306 = vld [vmem:[%s1 + $0x258] sm:$0xff]
  %v307 = vld [vmem:[%s1 + $0x260] sm:$0xff]
  %v308 = vld [vmem:[%s1 + $0x268] sm:$0xf]
  %v309 = vld [vmem:[%s1 + $0x26c] sm:$0xff]
  %v310 = vld [vmem:[%s1 + $0x274] sm:$0xff]
  %v311 = vld [vmem:[%s1 + $0x27c] sm:$0xf]
  %v408 = vunpack.c.l.b16 %v216
  %v409 = vunpack.c.h.b16 %v216
  %v410 = vunpack.c.l.b16 %v217
  %v411 = vunpack.c.h.b16 %v217
  %v412 = vunpack.c.l.b16 %v218
  %v413 = vunpack.c.l.b16 %v219
  %v414 = vunpack.c.h.b16 %v219
  %v415 = vunpack.c.l.b16 %v220
  %v416 = vunpack.c.h.b16 %v220
  %v417 = vunpack.c.l.b16 %v221
  %v418 = vunpack.c.l.b16 %v222
  %v419 = vunpack.c.h.b16 %v222
  %v420 = vunpack.c.l.b16 %v223
  %v421 = vunpack.c.h.b16 %v223
  %v422 = vunpack.c.l.b16 %v224
  %v423 = vunpack.c.l.b16 %v225
  %v424 = vunpack.c.h.b16 %v225
  %v425 = vunpack.c.l.b16 %v226
  %v426 = vunpack.c.h.b16 %v226
  %v427 = vunpack.c.l.b16 %v227
  %v428 = vunpack.c.l.b16 %v228
  %v429 = vunpack.c.h.b16 %v228
  %v430 = vunpack.c.l.b16 %v229
  %v431 = vunpack.c.h.b16 %v229
  %v432 = vunpack.c.l.b16 %v230
  %v433 = vunpack.c.l.b16 %v231
  %v434 = vunpack.c.h.b16 %v231
  %v435 = vunpack.c.l.b16 %v232
  %v436 = vunpack.c.h.b16 %v232
  %v437 = vunpack.c.l.b16 %v233
  %v438 = vunpack.c.l.b16 %v234
  %v439 = vunpack.c.h.b16 %v234
  %v440 = vunpack.c.l.b16 %v235
  %v441 = vunpack.c.h.b16 %v235
  %v442 = vunpack.c.l.b16 %v236
  %v443 = vunpack.c.l.b16 %v237
  %v444 = vunpack.c.h.b16 %v237
  %v445 = vunpack.c.l.b16 %v238
  %v446 = vunpack.c.h.b16 %v238
  %v447 = vunpack.c.l.b16 %v239
  %v448 = vunpack.c.l.b16 %v240
  %v449 = vunpack.c.h.b16 %v240
  %v450 = vunpack.c.l.b16 %v241
  %v451 = vunpack.c.h.b16 %v241
  %v452 = vunpack.c.l.b16 %v242
  %v453 = vunpack.c.l.b16 %v243
  %v454 = vunpack.c.h.b16 %v243
  %v455 = vunpack.c.l.b16 %v244
  %v456 = vunpack.c.h.b16 %v244
  %v457 = vunpack.c.l.b16 %v245
  %v458 = vunpack.c.l.b16 %v246
  %v459 = vunpack.c.h.b16 %v246
  %v460 = vunpack.c.l.b16 %v247
  %v461 = vunpack.c.h.b16 %v247
  %v462 = vunpack.c.l.b16 %v248
  %v463 = vunpack.c.l.b16 %v249
  %v464 = vunpack.c.h.b16 %v249
  %v465 = vunpack.c.l.b16 %v250
  %v466 = vunpack.c.h.b16 %v250
  %v467 = vunpack.c.l.b16 %v251
  %v468 = vunpack.c.l.b16 %v252
  %v469 = vunpack.c.h.b16 %v252
  %v470 = vunpack.c.l.b16 %v253
  %v471 = vunpack.c.h.b16 %v253
  %v472 = vunpack.c.l.b16 %v254
  %v473 = vunpack.c.l.b16 %v255
  %v474 = vunpack.c.h.b16 %v255
  %v475 = vunpack.c.l.b16 %v256
  %v476 = vunpack.c.h.b16 %v256
  %v477 = vunpack.c.l.b16 %v257
  %v478 = vunpack.c.l.b16 %v258
  %v479 = vunpack.c.h.b16 %v258
  %v480 = vunpack.c.l.b16 %v259
  %v481 = vunpack.c.h.b16 %v259
  %v482 = vunpack.c.l.b16 %v260
  %v483 = vunpack.c.l.b16 %v261
  %v484 = vunpack.c.h.b16 %v261
  %v485 = vunpack.c.l.b16 %v262
  %v486 = vunpack.c.h.b16 %v262
  %v487 = vunpack.c.l.b16 %v263
  %v488 = vunpack.c.l.b16 %v264
  %v489 = vunpack.c.h.b16 %v264
  %v490 = vunpack.c.l.b16 %v265
  %v491 = vunpack.c.h.b16 %v265
  %v492 = vunpack.c.l.b16 %v266
  %v493 = vunpack.c.l.b16 %v267
  %v494 = vunpack.c.h.b16 %v267
  %v495 = vunpack.c.l.b16 %v268
  %v496 = vunpack.c.h.b16 %v268
  %v497 = vunpack.c.l.b16 %v269
  %v498 = vunpack.c.l.b16 %v270
  %v499 = vunpack.c.h.b16 %v270
  %v500 = vunpack.c.l.b16 %v271
  %v501 = vunpack.c.h.b16 %v271
  %v502 = vunpack.c.l.b16 %v272
  %v503 = vunpack.c.l.b16 %v273
  %v504 = vunpack.c.h.b16 %v273
  %v505 = vunpack.c.l.b16 %v274
  %v506 = vunpack.c.h.b16 %v274
  %v507 = vunpack.c.l.b16 %v275
  %v508 = vunpack.c.l.b16 %v276
  %v509 = vunpack.c.h.b16 %v276
  %v510 = vunpack.c.l.b16 %v277
  %v511 = vunpack.c.h.b16 %v277
  %v512 = vunpack.c.l.b16 %v278
  %v513 = vunpack.c.l.b16 %v279
  %v514 = vunpack.c.h.b16 %v279
  %v515 = vunpack.c.l.b16 %v280
  %v516 = vunpack.c.h.b16 %v280
  %v517 = vunpack.c.l.b16 %v281
  %v518 = vunpack.c.l.b16 %v282
  %v519 = vunpack.c.h.b16 %v282
  %v520 = vunpack.c.l.b16 %v283
  %v521 = vunpack.c.h.b16 %v283
  %v522 = vunpack.c.l.b16 %v284
  %v523 = vunpack.c.l.b16 %v285
  %v524 = vunpack.c.h.b16 %v285
  %v525 = vunpack.c.l.b16 %v286
  %v526 = vunpack.c.h.b16 %v286
  %v527 = vunpack.c.l.b16 %v287
  %v528 = vunpack.c.l.b16 %v288
  %v529 = vunpack.c.h.b16 %v288
  %v530 = vunpack.c.l.b16 %v289
  %v531 = vunpack.c.h.b16 %v289
  %v532 = vunpack.c.l.b16 %v290
  %v533 = vunpack.c.l.b16 %v291
  %v534 = vunpack.c.h.b16 %v291
  %v535 = vunpack.c.l.b16 %v292
  %v536 = vunpack.c.h.b16 %v292
  %v537 = vunpack.c.l.b16 %v293
  %v538 = vunpack.c.l.b16 %v294
  %v539 = vunpack.c.h.b16 %v294
  %v540 = vunpack.c.l.b16 %v295
  %v541 = vunpack.c.h.b16 %v295
  %v542 = vunpack.c.l.b16 %v296
  %v543 = vunpack.c.l.b16 %v297
  %v544 = vunpack.c.h.b16 %v297
  %v545 = vunpack.c.l.b16 %v298
  %v546 = vunpack.c.h.b16 %v298
  %v547 = vunpack.c.l.b16 %v299
  %v548 = vunpack.c.l.b16 %v300
  %v549 = vunpack.c.h.b16 %v300
  %v550 = vunpack.c.l.b16 %v301
  %v551 = vunpack.c.h.b16 %v301
  %v552 = vunpack.c.l.b16 %v302
  %v553 = vunpack.c.l.b16 %v303
  %v554 = vunpack.c.h.b16 %v303
  %v555 = vunpack.c.l.b16 %v304
  %v556 = vunpack.c.h.b16 %v304
  %v557 = vunpack.c.l.b16 %v305
  %v558 = vunpack.c.l.b16 %v306
  %v559 = vunpack.c.h.b16 %v306
  %v560 = vunpack.c.l.b16 %v307
  %v561 = vunpack.c.h.b16 %v307
  %v562 = vunpack.c.l.b16 %v308
  %v563 = vunpack.c.l.b16 %v309
  %v564 = vunpack.c.h.b16 %v309
  %v565 = vunpack.c.l.b16 %v310
  %v566 = vunpack.c.h.b16 %v310
  %v567 = vunpack.c.l.b16 %v311
  %v568 = vpack.c.b16 %v413, %v408
  %v569 = vpack.c.b16 %v414, %v409
  %v570 = vpack.c.b16 %v415, %v410
  %v571 = vpack.c.b16 %v416, %v411
  %v572 = vpack.c.b16 %v417, %v412
  %v573 = vpack.c.b16 %v423, %v418
  %v574 = vpack.c.b16 %v424, %v419
  %v575 = vpack.c.b16 %v425, %v420
  %v576 = vpack.c.b16 %v426, %v421
  %v577 = vpack.c.b16 %v427, %v422
  %v578 = vpack.c.b16 %v433, %v428
  %v579 = vpack.c.b16 %v434, %v429
  %v580 = vpack.c.b16 %v435, %v430
  %v581 = vpack.c.b16 %v436, %v431
  %v582 = vpack.c.b16 %v437, %v432
  %v583 = vpack.c.b16 %v443, %v438
  %v584 = vpack.c.b16 %v444, %v439
  %v585 = vpack.c.b16 %v445, %v440
  %v586 = vpack.c.b16 %v446, %v441
  %v587 = vpack.c.b16 %v447, %v442
  %v588 = vpack.c.b16 %v453, %v448
  %v589 = vpack.c.b16 %v454, %v449
  %v590 = vpack.c.b16 %v455, %v450
  %v591 = vpack.c.b16 %v456, %v451
  %v592 = vpack.c.b16 %v457, %v452
  %v593 = vpack.c.b16 %v463, %v458
  %v594 = vpack.c.b16 %v464, %v459
  %v595 = vpack.c.b16 %v465, %v460
  %v596 = vpack.c.b16 %v466, %v461
  %v597 = vpack.c.b16 %v467, %v462
  %v598 = vpack.c.b16 %v473, %v468
  %v599 = vpack.c.b16 %v474, %v469
  %v600 = vpack.c.b16 %v475, %v470
  %v601 = vpack.c.b16 %v476, %v471
  %v602 = vpack.c.b16 %v477, %v472
  %v603 = vpack.c.b16 %v483, %v478
  %v604 = vpack.c.b16 %v484, %v479
  %v605 = vpack.c.b16 %v485, %v480
  %v606 = vpack.c.b16 %v486, %v481
  %v607 = vpack.c.b16 %v487, %v482
  %v608 = vpack.c.b16 %v493, %v488
  %v609 = vpack.c.b16 %v494, %v489
  %v610 = vpack.c.b16 %v495, %v490
  %v611 = vpack.c.b16 %v496, %v491
  %v612 = vpack.c.b16 %v497, %v492
  %v613 = vpack.c.b16 %v503, %v498
  %v614 = vpack.c.b16 %v504, %v499
  %v615 = vpack.c.b16 %v505, %v500
  %v616 = vpack.c.b16 %v506, %v501
  %v617 = vpack.c.b16 %v507, %v502
  %v618 = vpack.c.b16 %v513, %v508
  %v619 = vpack.c.b16 %v514, %v509
  %v620 = vpack.c.b16 %v515, %v510
  %v621 = vpack.c.b16 %v516, %v511
  %v622 = vpack.c.b16 %v517, %v512
  %v623 = vpack.c.b16 %v523, %v518
  %v624 = vpack.c.b16 %v524, %v519
  %v625 = vpack.c.b16 %v525, %v520
  %v626 = vpack.c.b16 %v526, %v521
  %v627 = vpack.c.b16 %v527, %v522
  %v628 = vpack.c.b16 %v533, %v528
  %v629 = vpack.c.b16 %v534, %v529
  %v630 = vpack.c.b16 %v535, %v530
  %v631 = vpack.c.b16 %v536, %v531
  %v632 = vpack.c.b16 %v537, %v532
  %v633 = vpack.c.b16 %v543, %v538
  %v634 = vpack.c.b16 %v544, %v539
  %v635 = vpack.c.b16 %v545, %v540
  %v636 = vpack.c.b16 %v546, %v541
  %v637 = vpack.c.b16 %v547, %v542
  %v638 = vpack.c.b16 %v553, %v548
  %v639 = vpack.c.b16 %v554, %v549
  %v640 = vpack.c.b16 %v555, %v550
  %v641 = vpack.c.b16 %v556, %v551
  %v642 = vpack.c.b16 %v557, %v552
  %v643 = vpack.c.b16 %v563, %v558
  %v644 = vpack.c.b16 %v564, %v559
  %v645 = vpack.c.b16 %v565, %v560
  %v646 = vpack.c.b16 %v566, %v561
  %v647 = vpack.c.b16 %v567, %v562
  %vm712 = vcmask 130048
  %v714 = vsel %vm712, %v572, 0
  %v717 = vsel %vm712, %v577, 0
  %v720 = vsel %vm712, %v582, 0
  %v723 = vsel %vm712, %v587, 0
  %v726 = vsel %vm712, %v592, 0
  %v729 = vsel %vm712, %v597, 0
  %v732 = vsel %vm712, %v602, 0
  %v735 = vsel %vm712, %v607, 0
  %v738 = vsel %vm712, %v612, 0
  %v741 = vsel %vm712, %v617, 0
  %v744 = vsel %vm712, %v622, 0
  %v747 = vsel %vm712, %v627, 0
  %v750 = vsel %vm712, %v632, 0
  %v753 = vsel %vm712, %v637, 0
  %v756 = vsel %vm712, %v642, 0
  %v759 = vsel %vm712, %v647, 0
  %761 = vmatpush.bf16.msra.mxu0 %v164
  %762 = vmatpush.bf16.msra.mxu0 %v162
  %763 = vmatpush.bf16.msra.mxu0 %v160
  %764 = vmatpush.bf16.msra.mxu0 %v158
  %765 = vmatpush.bf16.msra.mxu0 %v156
  %766 = vmatpush.bf16.msra.mxu0 %v154
  %767 = vmatpush.bf16.msra.mxu0 %v152
  %768 = vmatpush.bf16.msra.mxu0 %v150
  %769 = vmatmul.bf16.gmra.mxu0 %v568
  %v770 = vpop.f32.mrf.mxu0
  %v771 = vadd.f32 0.0, %v770
  %v772 = vpop.f32.mrf.mxu0
  %v773 = vadd.f32 0.0, %v772
  %774 = vmatmul.bf16.gmra.mxu0 %v573
  %v775 = vpop.f32.mrf.mxu0
  %v776 = vadd.f32 0.0, %v775
  %v777 = vpop.f32.mrf.mxu0
  %v778 = vadd.f32 0.0, %v777
  %779 = vmatmul.bf16.gmra.mxu0 %v578
  %v780 = vpop.f32.mrf.mxu0
  %v781 = vadd.f32 0.0, %v780
  %v782 = vpop.f32.mrf.mxu0
  %v783 = vadd.f32 0.0, %v782
  %784 = vmatmul.bf16.gmra.mxu0 %v583
  %v785 = vpop.f32.mrf.mxu0
  %v786 = vadd.f32 0.0, %v785
  %v787 = vpop.f32.mrf.mxu0
  %v788 = vadd.f32 0.0, %v787
  %789 = vmatmul.bf16.gmra.mxu0 %v588
  %v790 = vpop.f32.mrf.mxu0
  %v791 = vadd.f32 0.0, %v790
  %v792 = vpop.f32.mrf.mxu0
  %v793 = vadd.f32 0.0, %v792
  %794 = vmatmul.bf16.gmra.mxu0 %v593
  %v795 = vpop.f32.mrf.mxu0
  %v796 = vadd.f32 0.0, %v795
  %v797 = vpop.f32.mrf.mxu0
  %v798 = vadd.f32 0.0, %v797
  %799 = vmatmul.bf16.gmra.mxu0 %v598
  %v800 = vpop.f32.mrf.mxu0
  %v801 = vadd.f32 0.0, %v800
  %v802 = vpop.f32.mrf.mxu0
  %v803 = vadd.f32 0.0, %v802
  %804 = vmatmul.bf16.gmra.mxu0 %v603
  %v805 = vpop.f32.mrf.mxu0
  %v806 = vadd.f32 0.0, %v805
  %v807 = vpop.f32.mrf.mxu0
  %v808 = vadd.f32 0.0, %v807
  %809 = vmatmul.bf16.gmra.mxu0 %v608
  %v810 = vpop.f32.mrf.mxu0
  %v811 = vadd.f32 0.0, %v810
  %v812 = vpop.f32.mrf.mxu0
  %v813 = vadd.f32 0.0, %v812
  %814 = vmatmul.bf16.gmra.mxu0 %v613
  %v815 = vpop.f32.mrf.mxu0
  %v816 = vadd.f32 0.0, %v815
  %v817 = vpop.f32.mrf.mxu0
  %v818 = vadd.f32 0.0, %v817
  %819 = vmatmul.bf16.gmra.mxu0 %v618
  %v820 = vpop.f32.mrf.mxu0
  %v821 = vadd.f32 0.0, %v820
  %v822 = vpop.f32.mrf.mxu0
  %v823 = vadd.f32 0.0, %v822
  %824 = vmatmul.bf16.gmra.mxu0 %v623
  %v825 = vpop.f32.mrf.mxu0
  %v826 = vadd.f32 0.0, %v825
  %v827 = vpop.f32.mrf.mxu0
  %v828 = vadd.f32 0.0, %v827
  %829 = vmatmul.bf16.gmra.mxu0 %v628
  %v830 = vpop.f32.mrf.mxu0
  %v831 = vadd.f32 0.0, %v830
  %v832 = vpop.f32.mrf.mxu0
  %v833 = vadd.f32 0.0, %v832
  %834 = vmatmul.bf16.gmra.mxu0 %v633
  %v835 = vpop.f32.mrf.mxu0
  %v836 = vadd.f32 0.0, %v835
  %v837 = vpop.f32.mrf.mxu0
  %v838 = vadd.f32 0.0, %v837
  %839 = vmatmul.bf16.gmra.mxu0 %v638
  %v840 = vpop.f32.mrf.mxu0
  %v841 = vadd.f32 0.0, %v840
  %v842 = vpop.f32.mrf.mxu0
  %v843 = vadd.f32 0.0, %v842
  %844 = vmatmul.bf16.gmra.mxu0 %v643
  %v845 = vpop.f32.mrf.mxu0
  %v846 = vadd.f32 0.0, %v845
  %v847 = vpop.f32.mrf.mxu0
  %v848 = vadd.f32 0.0, %v847
  %849 = vdwg.mxu0
  %850 = vmatpush.bf16.msra.mxu0 %v180
  %851 = vmatpush.bf16.msra.mxu0 %v178
  %852 = vmatpush.bf16.msra.mxu0 %v176
  %853 = vmatpush.bf16.msra.mxu0 %v174
  %854 = vmatpush.bf16.msra.mxu0 %v172
  %855 = vmatpush.bf16.msra.mxu0 %v170
  %856 = vmatpush.bf16.msra.mxu0 %v168
  %857 = vmatpush.bf16.msra.mxu0 %v166
  %858 = vmatmul.bf16.gmra.mxu0 %v569
  %v859 = vpop.f32.mrf.mxu0
  %v860 = vadd.f32 %v771, %v859
  %v861 = vpop.f32.mrf.mxu0
  %v862 = vadd.f32 %v773, %v861
  %863 = vmatmul.bf16.gmra.mxu0 %v574
  %v864 = vpop.f32.mrf.mxu0
  %v865 = vadd.f32 %v776, %v864
  %v866 = vpop.f32.mrf.mxu0
  %v867 = vadd.f32 %v778, %v866
  %868 = vmatmul.bf16.gmra.mxu0 %v579
  %v869 = vpop.f32.mrf.mxu0
  %v870 = vadd.f32 %v781, %v869
  %v871 = vpop.f32.mrf.mxu0
  %v872 = vadd.f32 %v783, %v871
  %873 = vmatmul.bf16.gmra.mxu0 %v584
  %v874 = vpop.f32.mrf.mxu0
  %v875 = vadd.f32 %v786, %v874
  %v876 = vpop.f32.mrf.mxu0
  %v877 = vadd.f32 %v788, %v876
  %878 = vmatmul.bf16.gmra.mxu0 %v589
  %v879 = vpop.f32.mrf.mxu0
  %v880 = vadd.f32 %v791, %v879
  %v881 = vpop.f32.mrf.mxu0
  %v882 = vadd.f32 %v793, %v881
  %883 = vmatmul.bf16.gmra.mxu0 %v594
  %v884 = vpop.f32.mrf.mxu0
  %v885 = vadd.f32 %v796, %v884
  %v886 = vpop.f32.mrf.mxu0
  %v887 = vadd.f32 %v798, %v886
  %888 = vmatmul.bf16.gmra.mxu0 %v599
  %v889 = vpop.f32.mrf.mxu0
  %v890 = vadd.f32 %v801, %v889
  %v891 = vpop.f32.mrf.mxu0
  %v892 = vadd.f32 %v803, %v891
  %893 = vmatmul.bf16.gmra.mxu0 %v604
  %v894 = vpop.f32.mrf.mxu0
  %v895 = vadd.f32 %v806, %v894
  %v896 = vpop.f32.mrf.mxu0
  %v897 = vadd.f32 %v808, %v896
  %898 = vmatmul.bf16.gmra.mxu0 %v609
  %v899 = vpop.f32.mrf.mxu0
  %v900 = vadd.f32 %v811, %v899
  %v901 = vpop.f32.mrf.mxu0
  %v902 = vadd.f32 %v813, %v901
  %903 = vmatmul.bf16.gmra.mxu0 %v614
  %v904 = vpop.f32.mrf.mxu0
  %v905 = vadd.f32 %v816, %v904
  %v906 = vpop.f32.mrf.mxu0
  %v907 = vadd.f32 %v818, %v906
  %908 = vmatmul.bf16.gmra.mxu0 %v619
  %v909 = vpop.f32.mrf.mxu0
  %v910 = vadd.f32 %v821, %v909
  %v911 = vpop.f32.mrf.mxu0
  %v912 = vadd.f32 %v823, %v911
  %913 = vmatmul.bf16.gmra.mxu0 %v624
  %v914 = vpop.f32.mrf.mxu0
  %v915 = vadd.f32 %v826, %v914
  %v916 = vpop.f32.mrf.mxu0
  %v917 = vadd.f32 %v828, %v916
  %918 = vmatmul.bf16.gmra.mxu0 %v629
  %v919 = vpop.f32.mrf.mxu0
  %v920 = vadd.f32 %v831, %v919
  %v921 = vpop.f32.mrf.mxu0
  %v922 = vadd.f32 %v833, %v921
  %923 = vmatmul.bf16.gmra.mxu0 %v634
  %v924 = vpop.f32.mrf.mxu0
  %v925 = vadd.f32 %v836, %v924
  %v926 = vpop.f32.mrf.mxu0
  %v927 = vadd.f32 %v838, %v926
  %928 = vmatmul.bf16.gmra.mxu0 %v639
  %v929 = vpop.f32.mrf.mxu0
  %v930 = vadd.f32 %v841, %v929
  %v931 = vpop.f32.mrf.mxu0
  %v932 = vadd.f32 %v843, %v931
  %933 = vmatmul.bf16.gmra.mxu0 %v644
  %v934 = vpop.f32.mrf.mxu0
  %v935 = vadd.f32 %v846, %v934
  %v936 = vpop.f32.mrf.mxu0
  %v937 = vadd.f32 %v848, %v936
  %938 = vdwg.mxu0
  %939 = vmatpush.bf16.msra.mxu0 %v196
  %940 = vmatpush.bf16.msra.mxu0 %v194
  %941 = vmatpush.bf16.msra.mxu0 %v192
  %942 = vmatpush.bf16.msra.mxu0 %v190
  %943 = vmatpush.bf16.msra.mxu0 %v188
  %944 = vmatpush.bf16.msra.mxu0 %v186
  %945 = vmatpush.bf16.msra.mxu0 %v184
  %946 = vmatpush.bf16.msra.mxu0 %v182
  %947 = vmatmul.bf16.gmra.mxu0 %v570
  %v948 = vpop.f32.mrf.mxu0
  %v949 = vadd.f32 %v860, %v948
  %v950 = vpop.f32.mrf.mxu0
  %v951 = vadd.f32 %v862, %v950
  %952 = vmatmul.bf16.gmra.mxu0 %v575
  %v953 = vpop.f32.mrf.mxu0
  %v954 = vadd.f32 %v865, %v953
  %v955 = vpop.f32.mrf.mxu0
  %v956 = vadd.f32 %v867, %v955
  %957 = vmatmul.bf16.gmra.mxu0 %v580
  %v958 = vpop.f32.mrf.mxu0
  %v959 = vadd.f32 %v870, %v958
  %v960 = vpop.f32.mrf.mxu0
  %v961 = vadd.f32 %v872, %v960
  %962 = vmatmul.bf16.gmra.mxu0 %v585
  %v963 = vpop.f32.mrf.mxu0
  %v964 = vadd.f32 %v875, %v963
  %v965 = vpop.f32.mrf.mxu0
  %v966 = vadd.f32 %v877, %v965
  %967 = vmatmul.bf16.gmra.mxu0 %v590
  %v968 = vpop.f32.mrf.mxu0
  %v969 = vadd.f32 %v880, %v968
  %v970 = vpop.f32.mrf.mxu0
  %v971 = vadd.f32 %v882, %v970
  %972 = vmatmul.bf16.gmra.mxu0 %v595
  %v973 = vpop.f32.mrf.mxu0
  %v974 = vadd.f32 %v885, %v973
  %v975 = vpop.f32.mrf.mxu0
  %v976 = vadd.f32 %v887, %v975
  %977 = vmatmul.bf16.gmra.mxu0 %v600
  %v978 = vpop.f32.mrf.mxu0
  %v979 = vadd.f32 %v890, %v978
  %v980 = vpop.f32.mrf.mxu0
  %v981 = vadd.f32 %v892, %v980
  %982 = vmatmul.bf16.gmra.mxu0 %v605
  %v983 = vpop.f32.mrf.mxu0
  %v984 = vadd.f32 %v895, %v983
  %v985 = vpop.f32.mrf.mxu0
  %v986 = vadd.f32 %v897, %v985
  %987 = vmatmul.bf16.gmra.mxu0 %v610
  %v988 = vpop.f32.mrf.mxu0
  %v989 = vadd.f32 %v900, %v988
  %v990 = vpop.f32.mrf.mxu0
  %v991 = vadd.f32 %v902, %v990
  %992 = vmatmul.bf16.gmra.mxu0 %v615
  %v993 = vpop.f32.mrf.mxu0
  %v994 = vadd.f32 %v905, %v993
  %v995 = vpop.f32.mrf.mxu0
  %v996 = vadd.f32 %v907, %v995
  %997 = vmatmul.bf16.gmra.mxu0 %v620
  %v998 = vpop.f32.mrf.mxu0
  %v999 = vadd.f32 %v910, %v998
  %v1000 = vpop.f32.mrf.mxu0
  %v1001 = vadd.f32 %v912, %v1000
  %1002 = vmatmul.bf16.gmra.mxu0 %v625
  %v1003 = vpop.f32.mrf.mxu0
  %v1004 = vadd.f32 %v915, %v1003
  %v1005 = vpop.f32.mrf.mxu0
  %v1006 = vadd.f32 %v917, %v1005
  %1007 = vmatmul.bf16.gmra.mxu0 %v630
  %v1008 = vpop.f32.mrf.mxu0
  %v1009 = vadd.f32 %v920, %v1008
  %v1010 = vpop.f32.mrf.mxu0
  %v1011 = vadd.f32 %v922, %v1010
  %1012 = vmatmul.bf16.gmra.mxu0 %v635
  %v1013 = vpop.f32.mrf.mxu0
  %v1014 = vadd.f32 %v925, %v1013
  %v1015 = vpop.f32.mrf.mxu0
  %v1016 = vadd.f32 %v927, %v1015
  %1017 = vmatmul.bf16.gmra.mxu0 %v640
  %v1018 = vpop.f32.mrf.mxu0
  %v1019 = vadd.f32 %v930, %v1018
  %v1020 = vpop.f32.mrf.mxu0
  %v1021 = vadd.f32 %v932, %v1020
  %1022 = vmatmul.bf16.gmra.mxu0 %v645
  %v1023 = vpop.f32.mrf.mxu0
  %v1024 = vadd.f32 %v935, %v1023
  %v1025 = vpop.f32.mrf.mxu0
  %v1026 = vadd.f32 %v937, %v1025
  %1027 = vdwg.mxu0
  %1028 = vmatpush.bf16.msra.mxu0 %v212
  %1029 = vmatpush.bf16.msra.mxu0 %v210
  %1030 = vmatpush.bf16.msra.mxu0 %v208
  %1031 = vmatpush.bf16.msra.mxu0 %v206
  %1032 = vmatpush.bf16.msra.mxu0 %v204
  %1033 = vmatpush.bf16.msra.mxu0 %v202
  %1034 = vmatpush.bf16.msra.mxu0 %v200
  %1035 = vmatpush.bf16.msra.mxu0 %v198
  %1036 = vmatmul.bf16.gmra.mxu0 %v571
  %v1037 = vpop.f32.mrf.mxu0
  %v1038 = vadd.f32 %v949, %v1037
  %v1039 = vpop.f32.mrf.mxu0
  %v1040 = vadd.f32 %v951, %v1039
  %1041 = vmatmul.bf16.gmra.mxu0 %v576
  %v1042 = vpop.f32.mrf.mxu0
  %v1043 = vadd.f32 %v954, %v1042
  %v1044 = vpop.f32.mrf.mxu0
  %v1045 = vadd.f32 %v956, %v1044
  %1046 = vmatmul.bf16.gmra.mxu0 %v581
  %v1047 = vpop.f32.mrf.mxu0
  %v1048 = vadd.f32 %v959, %v1047
  %v1049 = vpop.f32.mrf.mxu0
  %v1050 = vadd.f32 %v961, %v1049
  %1051 = vmatmul.bf16.gmra.mxu0 %v586
  %v1052 = vpop.f32.mrf.mxu0
  %v1053 = vadd.f32 %v964, %v1052
  %v1054 = vpop.f32.mrf.mxu0
  %v1055 = vadd.f32 %v966, %v1054
  %1056 = vmatmul.bf16.gmra.mxu0 %v591
  %v1057 = vpop.f32.mrf.mxu0
  %v1058 = vadd.f32 %v969, %v1057
  %v1059 = vpop.f32.mrf.mxu0
  %v1060 = vadd.f32 %v971, %v1059
  %1061 = vmatmul.bf16.gmra.mxu0 %v596
  %v1062 = vpop.f32.mrf.mxu0
  %v1063 = vadd.f32 %v974, %v1062
  %v1064 = vpop.f32.mrf.mxu0
  %v1065 = vadd.f32 %v976, %v1064
  %1066 = vmatmul.bf16.gmra.mxu0 %v601
  %v1067 = vpop.f32.mrf.mxu0
  %v1068 = vadd.f32 %v979, %v1067
  %v1069 = vpop.f32.mrf.mxu0
  %v1070 = vadd.f32 %v981, %v1069
  %1071 = vmatmul.bf16.gmra.mxu0 %v606
  %v1072 = vpop.f32.mrf.mxu0
  %v1073 = vadd.f32 %v984, %v1072
  %v1074 = vpop.f32.mrf.mxu0
  %v1075 = vadd.f32 %v986, %v1074
  %1076 = vmatmul.bf16.gmra.mxu0 %v611
  %v1077 = vpop.f32.mrf.mxu0
  %v1078 = vadd.f32 %v989, %v1077
  %v1079 = vpop.f32.mrf.mxu0
  %v1080 = vadd.f32 %v991, %v1079
  %1081 = vmatmul.bf16.gmra.mxu0 %v616
  %v1082 = vpop.f32.mrf.mxu0
  %v1083 = vadd.f32 %v994, %v1082
  %v1084 = vpop.f32.mrf.mxu0
  %v1085 = vadd.f32 %v996, %v1084
  %1086 = vmatmul.bf16.gmra.mxu0 %v621
  %v1087 = vpop.f32.mrf.mxu0
  %v1088 = vadd.f32 %v999, %v1087
  %v1089 = vpop.f32.mrf.mxu0
  %v1090 = vadd.f32 %v1001, %v1089
  %1091 = vmatmul.bf16.gmra.mxu0 %v626
  %v1092 = vpop.f32.mrf.mxu0
  %v1093 = vadd.f32 %v1004, %v1092
  %v1094 = vpop.f32.mrf.mxu0
  %v1095 = vadd.f32 %v1006, %v1094
  %1096 = vmatmul.bf16.gmra.mxu0 %v631
  %v1097 = vpop.f32.mrf.mxu0
  %v1098 = vadd.f32 %v1009, %v1097
  %v1099 = vpop.f32.mrf.mxu0
  %v1100 = vadd.f32 %v1011, %v1099
  %1101 = vmatmul.bf16.gmra.mxu0 %v636
  %v1102 = vpop.f32.mrf.mxu0
  %v1103 = vadd.f32 %v1014, %v1102
  %v1104 = vpop.f32.mrf.mxu0
  %v1105 = vadd.f32 %v1016, %v1104
  %1106 = vmatmul.bf16.gmra.mxu0 %v641
  %v1107 = vpop.f32.mrf.mxu0
  %v1108 = vadd.f32 %v1019, %v1107
  %v1109 = vpop.f32.mrf.mxu0
  %v1110 = vadd.f32 %v1021, %v1109
  %1111 = vmatmul.bf16.gmra.mxu0 %v646
  %v1112 = vpop.f32.mrf.mxu0
  %v1113 = vadd.f32 %v1024, %v1112
  %v1114 = vpop.f32.mrf.mxu0
  %v1115 = vadd.f32 %v1026, %v1114
  %1116 = vdwg.mxu0
  %1117 = vmatpush.bf16.msra.mxu0 0
  %1118 = vmatpush.bf16.msra.mxu0 0
  %1119 = vmatpush.bf16.msra.mxu0 0
  %1120 = vmatpush.bf16.msra.mxu0 0
  %1121 = vmatpush.bf16.msra.mxu0 0
  %1122 = vmatpush.bf16.msra.mxu0 0
  %1123 = vmatpush.bf16.msra.mxu0 0
  %1124 = vmatpush.bf16.msra.mxu0 %v214
  %1125 = vmatmul.bf16.gmra.mxu0 %v714
  %v1126 = vpop.f32.mrf.mxu0
  %v1127 = vadd.f32 %v1038, %v1126
  %v1128 = vpop.f32.mrf.mxu0
  %v1129 = vadd.f32 %v1040, %v1128
  %1130 = vmatmul.bf16.gmra.mxu0 %v717
  %v1131 = vpop.f32.mrf.mxu0
  %v1132 = vadd.f32 %v1043, %v1131
  %v1133 = vpop.f32.mrf.mxu0
  %v1134 = vadd.f32 %v1045, %v1133
  %1135 = vmatmul.bf16.gmra.mxu0 %v720
  %v1136 = vpop.f32.mrf.mxu0
  %v1137 = vadd.f32 %v1048, %v1136
  %v1138 = vpop.f32.mrf.mxu0
  %v1139 = vadd.f32 %v1050, %v1138
  %1140 = vmatmul.bf16.gmra.mxu0 %v723
  %v1141 = vpop.f32.mrf.mxu0
  %v1142 = vadd.f32 %v1053, %v1141
  %v1143 = vpop.f32.mrf.mxu0
  %v1144 = vadd.f32 %v1055, %v1143
  %1145 = vmatmul.bf16.gmra.mxu0 %v726
  %v1146 = vpop.f32.mrf.mxu0
  %v1147 = vadd.f32 %v1058, %v1146
  %v1148 = vpop.f32.mrf.mxu0
  %v1149 = vadd.f32 %v1060, %v1148
  %1150 = vmatmul.bf16.gmra.mxu0 %v729
  %v1151 = vpop.f32.mrf.mxu0
  %v1152 = vadd.f32 %v1063, %v1151
  %v1153 = vpop.f32.mrf.mxu0
  %v1154 = vadd.f32 %v1065, %v1153
  %1155 = vmatmul.bf16.gmra.mxu0 %v732
  %v1156 = vpop.f32.mrf.mxu0
  %v1157 = vadd.f32 %v1068, %v1156
  %v1158 = vpop.f32.mrf.mxu0
  %v1159 = vadd.f32 %v1070, %v1158
  %1160 = vmatmul.bf16.gmra.mxu0 %v735
  %v1161 = vpop.f32.mrf.mxu0
  %v1162 = vadd.f32 %v1073, %v1161
  %v1163 = vpop.f32.mrf.mxu0
  %v1164 = vadd.f32 %v1075, %v1163
  %1165 = vmatmul.bf16.gmra.mxu0 %v738
  %v1166 = vpop.f32.mrf.mxu0
  %v1167 = vadd.f32 %v1078, %v1166
  %v1168 = vpop.f32.mrf.mxu0
  %v1169 = vadd.f32 %v1080, %v1168
  %1170 = vmatmul.bf16.gmra.mxu0 %v741
  %v1171 = vpop.f32.mrf.mxu0
  %v1172 = vadd.f32 %v1083, %v1171
  %v1173 = vpop.f32.mrf.mxu0
  %v1174 = vadd.f32 %v1085, %v1173
  %1175 = vmatmul.bf16.gmra.mxu0 %v744
  %v1176 = vpop.f32.mrf.mxu0
  %v1177 = vadd.f32 %v1088, %v1176
  %v1178 = vpop.f32.mrf.mxu0
  %v1179 = vadd.f32 %v1090, %v1178
  %1180 = vmatmul.bf16.gmra.mxu0 %v747
  %v1181 = vpop.f32.mrf.mxu0
  %v1182 = vadd.f32 %v1093, %v1181
  %v1183 = vpop.f32.mrf.mxu0
  %v1184 = vadd.f32 %v1095, %v1183
  %1185 = vmatmul.bf16.gmra.mxu0 %v750
  %v1186 = vpop.f32.mrf.mxu0
  %v1187 = vadd.f32 %v1098, %v1186
  %v1188 = vpop.f32.mrf.mxu0
  %v1189 = vadd.f32 %v1100, %v1188
  %1190 = vmatmul.bf16.gmra.mxu0 %v753
  %v1191 = vpop.f32.mrf.mxu0
  %v1192 = vadd.f32 %v1103, %v1191
  %v1193 = vpop.f32.mrf.mxu0
  %v1194 = vadd.f32 %v1105, %v1193
  %1195 = vmatmul.bf16.gmra.mxu0 %v756
  %v1196 = vpop.f32.mrf.mxu0
  %v1197 = vadd.f32 %v1108, %v1196
  %v1198 = vpop.f32.mrf.mxu0
  %v1199 = vadd.f32 %v1110, %v1198
  %1200 = vmatmul.bf16.gmra.mxu0 %v759
  %v1201 = vpop.f32.mrf.mxu0
  %v1202 = vadd.f32 %v1113, %v1201
  %v1203 = vpop.f32.mrf.mxu0
  %v1204 = vadd.f32 %v1115, %v1203
  %1205 = vdwg.mxu0
  %1206 = vmatpush.bf16.msra.mxu0 %v165
  %1207 = vmatpush.bf16.msra.mxu0 %v163
  %1208 = vmatpush.bf16.msra.mxu0 %v161
  %1209 = vmatpush.bf16.msra.mxu0 %v159
  %1210 = vmatpush.bf16.msra.mxu0 %v157
  %1211 = vmatpush.bf16.msra.mxu0 %v155
  %1212 = vmatpush.bf16.msra.mxu0 %v153
  %1213 = vmatpush.bf16.msra.mxu0 %v151
  %1214 = vmatmul.bf16.gmra.mxu0 %v568
  %v1215 = vpop.f32.mrf.mxu0
  %v1216 = vadd.f32 0.0, %v1215
  %v1217 = vpop.f32.mrf.mxu0
  %v1218 = vadd.f32 0.0, %v1217
  %1219 = vmatmul.bf16.gmra.mxu0 %v573
  %v1220 = vpop.f32.mrf.mxu0
  %v1221 = vadd.f32 0.0, %v1220
  %v1222 = vpop.f32.mrf.mxu0
  %v1223 = vadd.f32 0.0, %v1222
  %1224 = vmatmul.bf16.gmra.mxu0 %v578
  %v1225 = vpop.f32.mrf.mxu0
  %v1226 = vadd.f32 0.0, %v1225
  %v1227 = vpop.f32.mrf.mxu0
  %v1228 = vadd.f32 0.0, %v1227
  %1229 = vmatmul.bf16.gmra.mxu0 %v583
  %v1230 = vpop.f32.mrf.mxu0
  %v1231 = vadd.f32 0.0, %v1230
  %v1232 = vpop.f32.mrf.mxu0
  %v1233 = vadd.f32 0.0, %v1232
  %1234 = vmatmul.bf16.gmra.mxu0 %v588
  %v1235 = vpop.f32.mrf.mxu0
  %v1236 = vadd.f32 0.0, %v1235
  %v1237 = vpop.f32.mrf.mxu0
  %v1238 = vadd.f32 0.0, %v1237
  %1239 = vmatmul.bf16.gmra.mxu0 %v593
  %v1240 = vpop.f32.mrf.mxu0
  %v1241 = vadd.f32 0.0, %v1240
  %v1242 = vpop.f32.mrf.mxu0
  %v1243 = vadd.f32 0.0, %v1242
  %1244 = vmatmul.bf16.gmra.mxu0 %v598
  %v1245 = vpop.f32.mrf.mxu0
  %v1246 = vadd.f32 0.0, %v1245
  %v1247 = vpop.f32.mrf.mxu0
  %v1248 = vadd.f32 0.0, %v1247
  %1249 = vmatmul.bf16.gmra.mxu0 %v603
  %v1250 = vpop.f32.mrf.mxu0
  %v1251 = vadd.f32 0.0, %v1250
  %v1252 = vpop.f32.mrf.mxu0
  %v1253 = vadd.f32 0.0, %v1252
  %1254 = vmatmul.bf16.gmra.mxu0 %v608
  %v1255 = vpop.f32.mrf.mxu0
  %v1256 = vadd.f32 0.0, %v1255
  %v1257 = vpop.f32.mrf.mxu0
  %v1258 = vadd.f32 0.0, %v1257
  %1259 = vmatmul.bf16.gmra.mxu0 %v613
  %v1260 = vpop.f32.mrf.mxu0
  %v1261 = vadd.f32 0.0, %v1260
  %v1262 = vpop.f32.mrf.mxu0
  %v1263 = vadd.f32 0.0, %v1262
  %1264 = vmatmul.bf16.gmra.mxu0 %v618
  %v1265 = vpop.f32.mrf.mxu0
  %v1266 = vadd.f32 0.0, %v1265
  %v1267 = vpop.f32.mrf.mxu0
  %v1268 = vadd.f32 0.0, %v1267
  %1269 = vmatmul.bf16.gmra.mxu0 %v623
  %v1270 = vpop.f32.mrf.mxu0
  %v1271 = vadd.f32 0.0, %v1270
  %v1272 = vpop.f32.mrf.mxu0
  %v1273 = vadd.f32 0.0, %v1272
  %1274 = vmatmul.bf16.gmra.mxu0 %v628
  %v1275 = vpop.f32.mrf.mxu0
  %v1276 = vadd.f32 0.0, %v1275
  %v1277 = vpop.f32.mrf.mxu0
  %v1278 = vadd.f32 0.0, %v1277
  %1279 = vmatmul.bf16.gmra.mxu0 %v633
  %v1280 = vpop.f32.mrf.mxu0
  %v1281 = vadd.f32 0.0, %v1280
  %v1282 = vpop.f32.mrf.mxu0
  %v1283 = vadd.f32 0.0, %v1282
  %1284 = vmatmul.bf16.gmra.mxu0 %v638
  %v1285 = vpop.f32.mrf.mxu0
  %v1286 = vadd.f32 0.0, %v1285
  %v1287 = vpop.f32.mrf.mxu0
  %v1288 = vadd.f32 0.0, %v1287
  %1289 = vmatmul.bf16.gmra.mxu0 %v643
  %v1290 = vpop.f32.mrf.mxu0
  %v1291 = vadd.f32 0.0, %v1290
  %v1292 = vpop.f32.mrf.mxu0
  %v1293 = vadd.f32 0.0, %v1292
  %1294 = vdwg.mxu0
  %1295 = vmatpush.bf16.msra.mxu0 %v181
  %1296 = vmatpush.bf16.msra.mxu0 %v179
  %1297 = vmatpush.bf16.msra.mxu0 %v177
  %1298 = vmatpush.bf16.msra.mxu0 %v175
  %1299 = vmatpush.bf16.msra.mxu0 %v173
  %1300 = vmatpush.bf16.msra.mxu0 %v171
  %1301 = vmatpush.bf16.msra.mxu0 %v169
  %1302 = vmatpush.bf16.msra.mxu0 %v167
  %1303 = vmatmul.bf16.gmra.mxu0 %v569
  %v1304 = vpop.f32.mrf.mxu0
  %v1305 = vadd.f32 %v1216, %v1304
  %v1306 = vpop.f32.mrf.mxu0
  %v1307 = vadd.f32 %v1218, %v1306
  %1308 = vmatmul.bf16.gmra.mxu0 %v574
  %v1309 = vpop.f32.mrf.mxu0
  %v1310 = vadd.f32 %v1221, %v1309
  %v1311 = vpop.f32.mrf.mxu0
  %v1312 = vadd.f32 %v1223, %v1311
  %1313 = vmatmul.bf16.gmra.mxu0 %v579
  %v1314 = vpop.f32.mrf.mxu0
  %v1315 = vadd.f32 %v1226, %v1314
  %v1316 = vpop.f32.mrf.mxu0
  %v1317 = vadd.f32 %v1228, %v1316
  %1318 = vmatmul.bf16.gmra.mxu0 %v584
  %v1319 = vpop.f32.mrf.mxu0
  %v1320 = vadd.f32 %v1231, %v1319
  %v1321 = vpop.f32.mrf.mxu0
  %v1322 = vadd.f32 %v1233, %v1321
  %1323 = vmatmul.bf16.gmra.mxu0 %v589
  %v1324 = vpop.f32.mrf.mxu0
  %v1325 = vadd.f32 %v1236, %v1324
  %v1326 = vpop.f32.mrf.mxu0
  %v1327 = vadd.f32 %v1238, %v1326
  %1328 = vmatmul.bf16.gmra.mxu0 %v594
  %v1329 = vpop.f32.mrf.mxu0
  %v1330 = vadd.f32 %v1241, %v1329
  %v1331 = vpop.f32.mrf.mxu0
  %v1332 = vadd.f32 %v1243, %v1331
  %1333 = vmatmul.bf16.gmra.mxu0 %v599
  %v1334 = vpop.f32.mrf.mxu0
  %v1335 = vadd.f32 %v1246, %v1334
  %v1336 = vpop.f32.mrf.mxu0
  %v1337 = vadd.f32 %v1248, %v1336
  %1338 = vmatmul.bf16.gmra.mxu0 %v604
  %v1339 = vpop.f32.mrf.mxu0
  %v1340 = vadd.f32 %v1251, %v1339
  %v1341 = vpop.f32.mrf.mxu0
  %v1342 = vadd.f32 %v1253, %v1341
  %1343 = vmatmul.bf16.gmra.mxu0 %v609
  %v1344 = vpop.f32.mrf.mxu0
  %v1345 = vadd.f32 %v1256, %v1344
  %v1346 = vpop.f32.mrf.mxu0
  %v1347 = vadd.f32 %v1258, %v1346
  %1348 = vmatmul.bf16.gmra.mxu0 %v614
  %v1349 = vpop.f32.mrf.mxu0
  %v1350 = vadd.f32 %v1261, %v1349
  %v1351 = vpop.f32.mrf.mxu0
  %v1352 = vadd.f32 %v1263, %v1351
  %1353 = vmatmul.bf16.gmra.mxu0 %v619
  %v1354 = vpop.f32.mrf.mxu0
  %v1355 = vadd.f32 %v1266, %v1354
  %v1356 = vpop.f32.mrf.mxu0
  %v1357 = vadd.f32 %v1268, %v1356
  %1358 = vmatmul.bf16.gmra.mxu0 %v624
  %v1359 = vpop.f32.mrf.mxu0
  %v1360 = vadd.f32 %v1271, %v1359
  %v1361 = vpop.f32.mrf.mxu0
  %v1362 = vadd.f32 %v1273, %v1361
  %1363 = vmatmul.bf16.gmra.mxu0 %v629
  %v1364 = vpop.f32.mrf.mxu0
  %v1365 = vadd.f32 %v1276, %v1364
  %v1366 = vpop.f32.mrf.mxu0
  %v1367 = vadd.f32 %v1278, %v1366
  %1368 = vmatmul.bf16.gmra.mxu0 %v634
  %v1369 = vpop.f32.mrf.mxu0
  %v1370 = vadd.f32 %v1281, %v1369
  %v1371 = vpop.f32.mrf.mxu0
  %v1372 = vadd.f32 %v1283, %v1371
  %1373 = vmatmul.bf16.gmra.mxu0 %v639
  %v1374 = vpop.f32.mrf.mxu0
  %v1375 = vadd.f32 %v1286, %v1374
  %v1376 = vpop.f32.mrf.mxu0
  %v1377 = vadd.f32 %v1288, %v1376
  %1378 = vmatmul.bf16.gmra.mxu0 %v644
  %v1379 = vpop.f32.mrf.mxu0
  %v1380 = vadd.f32 %v1291, %v1379
  %v1381 = vpop.f32.mrf.mxu0
  %v1382 = vadd.f32 %v1293, %v1381
  %1383 = vdwg.mxu0
  %1384 = vmatpush.bf16.msra.mxu0 %v197
  %1385 = vmatpush.bf16.msra.mxu0 %v195
  %1386 = vmatpush.bf16.msra.mxu0 %v193
  %1387 = vmatpush.bf16.msra.mxu0 %v191
  %1388 = vmatpush.bf16.msra.mxu0 %v189
  %1389 = vmatpush.bf16.msra.mxu0 %v187
  %1390 = vmatpush.bf16.msra.mxu0 %v185
  %1391 = vmatpush.bf16.msra.mxu0 %v183
  %1392 = vmatmul.bf16.gmra.mxu0 %v570
  %v1393 = vpop.f32.mrf.mxu0
  %v1394 = vadd.f32 %v1305, %v1393
  %v1395 = vpop.f32.mrf.mxu0
  %v1396 = vadd.f32 %v1307, %v1395
  %1397 = vmatmul.bf16.gmra.mxu0 %v575
  %v1398 = vpop.f32.mrf.mxu0
  %v1399 = vadd.f32 %v1310, %v1398
  %v1400 = vpop.f32.mrf.mxu0
  %v1401 = vadd.f32 %v1312, %v1400
  %1402 = vmatmul.bf16.gmra.mxu0 %v580
  %v1403 = vpop.f32.mrf.mxu0
  %v1404 = vadd.f32 %v1315, %v1403
  %v1405 = vpop.f32.mrf.mxu0
  %v1406 = vadd.f32 %v1317, %v1405
  %1407 = vmatmul.bf16.gmra.mxu0 %v585
  %v1408 = vpop.f32.mrf.mxu0
  %v1409 = vadd.f32 %v1320, %v1408
  %v1410 = vpop.f32.mrf.mxu0
  %v1411 = vadd.f32 %v1322, %v1410
  %1412 = vmatmul.bf16.gmra.mxu0 %v590
  %v1413 = vpop.f32.mrf.mxu0
  %v1414 = vadd.f32 %v1325, %v1413
  %v1415 = vpop.f32.mrf.mxu0
  %v1416 = vadd.f32 %v1327, %v1415
  %1417 = vmatmul.bf16.gmra.mxu0 %v595
  %v1418 = vpop.f32.mrf.mxu0
  %v1419 = vadd.f32 %v1330, %v1418
  %v1420 = vpop.f32.mrf.mxu0
  %v1421 = vadd.f32 %v1332, %v1420
  %1422 = vmatmul.bf16.gmra.mxu0 %v600
  %v1423 = vpop.f32.mrf.mxu0
  %v1424 = vadd.f32 %v1335, %v1423
  %v1425 = vpop.f32.mrf.mxu0
  %v1426 = vadd.f32 %v1337, %v1425
  %1427 = vmatmul.bf16.gmra.mxu0 %v605
  %v1428 = vpop.f32.mrf.mxu0
  %v1429 = vadd.f32 %v1340, %v1428
  %v1430 = vpop.f32.mrf.mxu0
  %v1431 = vadd.f32 %v1342, %v1430
  %1432 = vmatmul.bf16.gmra.mxu0 %v610
  %v1433 = vpop.f32.mrf.mxu0
  %v1434 = vadd.f32 %v1345, %v1433
  %v1435 = vpop.f32.mrf.mxu0
  %v1436 = vadd.f32 %v1347, %v1435
  %1437 = vmatmul.bf16.gmra.mxu0 %v615
  %v1438 = vpop.f32.mrf.mxu0
  %v1439 = vadd.f32 %v1350, %v1438
  %v1440 = vpop.f32.mrf.mxu0
  %v1441 = vadd.f32 %v1352, %v1440
  %1442 = vmatmul.bf16.gmra.mxu0 %v620
  %v1443 = vpop.f32.mrf.mxu0
  %v1444 = vadd.f32 %v1355, %v1443
  %v1445 = vpop.f32.mrf.mxu0
  %v1446 = vadd.f32 %v1357, %v1445
  %1447 = vmatmul.bf16.gmra.mxu0 %v625
  %v1448 = vpop.f32.mrf.mxu0
  %v1449 = vadd.f32 %v1360, %v1448
  %v1450 = vpop.f32.mrf.mxu0
  %v1451 = vadd.f32 %v1362, %v1450
  %1452 = vmatmul.bf16.gmra.mxu0 %v630
  %v1453 = vpop.f32.mrf.mxu0
  %v1454 = vadd.f32 %v1365, %v1453
  %v1455 = vpop.f32.mrf.mxu0
  %v1456 = vadd.f32 %v1367, %v1455
  %1457 = vmatmul.bf16.gmra.mxu0 %v635
  %v1458 = vpop.f32.mrf.mxu0
  %v1459 = vadd.f32 %v1370, %v1458
  %v1460 = vpop.f32.mrf.mxu0
  %v1461 = vadd.f32 %v1372, %v1460
  %1462 = vmatmul.bf16.gmra.mxu0 %v640
  %v1463 = vpop.f32.mrf.mxu0
  %v1464 = vadd.f32 %v1375, %v1463
  %v1465 = vpop.f32.mrf.mxu0
  %v1466 = vadd.f32 %v1377, %v1465
  %1467 = vmatmul.bf16.gmra.mxu0 %v645
  %v1468 = vpop.f32.mrf.mxu0
  %v1469 = vadd.f32 %v1380, %v1468
  %v1470 = vpop.f32.mrf.mxu0
  %v1471 = vadd.f32 %v1382, %v1470
  %1472 = vdwg.mxu0
  %1473 = vmatpush.bf16.msra.mxu0 %v213
  %1474 = vmatpush.bf16.msra.mxu0 %v211
  %1475 = vmatpush.bf16.msra.mxu0 %v209
  %1476 = vmatpush.bf16.msra.mxu0 %v207
  %1477 = vmatpush.bf16.msra.mxu0 %v205
  %1478 = vmatpush.bf16.msra.mxu0 %v203
  %1479 = vmatpush.bf16.msra.mxu0 %v201
  %1480 = vmatpush.bf16.msra.mxu0 %v199
  %1481 = vmatmul.bf16.gmra.mxu0 %v571
  %v1482 = vpop.f32.mrf.mxu0
  %v1483 = vadd.f32 %v1394, %v1482
  %v1484 = vpop.f32.mrf.mxu0
  %v1485 = vadd.f32 %v1396, %v1484
  %1486 = vmatmul.bf16.gmra.mxu0 %v576
  %v1487 = vpop.f32.mrf.mxu0
  %v1488 = vadd.f32 %v1399, %v1487
  %v1489 = vpop.f32.mrf.mxu0
  %v1490 = vadd.f32 %v1401, %v1489
  %1491 = vmatmul.bf16.gmra.mxu0 %v581
  %v1492 = vpop.f32.mrf.mxu0
  %v1493 = vadd.f32 %v1404, %v1492
  %v1494 = vpop.f32.mrf.mxu0
  %v1495 = vadd.f32 %v1406, %v1494
  %1496 = vmatmul.bf16.gmra.mxu0 %v586
  %v1497 = vpop.f32.mrf.mxu0
  %v1498 = vadd.f32 %v1409, %v1497
  %v1499 = vpop.f32.mrf.mxu0
  %v1500 = vadd.f32 %v1411, %v1499
  %1501 = vmatmul.bf16.gmra.mxu0 %v591
  %v1502 = vpop.f32.mrf.mxu0
  %v1503 = vadd.f32 %v1414, %v1502
  %v1504 = vpop.f32.mrf.mxu0
  %v1505 = vadd.f32 %v1416, %v1504
  %1506 = vmatmul.bf16.gmra.mxu0 %v596
  %v1507 = vpop.f32.mrf.mxu0
  %v1508 = vadd.f32 %v1419, %v1507
  %v1509 = vpop.f32.mrf.mxu0
  %v1510 = vadd.f32 %v1421, %v1509
  %1511 = vmatmul.bf16.gmra.mxu0 %v601
  %v1512 = vpop.f32.mrf.mxu0
  %v1513 = vadd.f32 %v1424, %v1512
  %v1514 = vpop.f32.mrf.mxu0
  %v1515 = vadd.f32 %v1426, %v1514
  %1516 = vmatmul.bf16.gmra.mxu0 %v606
  %v1517 = vpop.f32.mrf.mxu0
  %v1518 = vadd.f32 %v1429, %v1517
  %v1519 = vpop.f32.mrf.mxu0
  %v1520 = vadd.f32 %v1431, %v1519
  %1521 = vmatmul.bf16.gmra.mxu0 %v611
  %v1522 = vpop.f32.mrf.mxu0
  %v1523 = vadd.f32 %v1434, %v1522
  %v1524 = vpop.f32.mrf.mxu0
  %v1525 = vadd.f32 %v1436, %v1524
  %1526 = vmatmul.bf16.gmra.mxu0 %v616
  %v1527 = vpop.f32.mrf.mxu0
  %v1528 = vadd.f32 %v1439, %v1527
  %v1529 = vpop.f32.mrf.mxu0
  %v1530 = vadd.f32 %v1441, %v1529
  %1531 = vmatmul.bf16.gmra.mxu0 %v621
  %v1532 = vpop.f32.mrf.mxu0
  %v1533 = vadd.f32 %v1444, %v1532
  %v1534 = vpop.f32.mrf.mxu0
  %v1535 = vadd.f32 %v1446, %v1534
  %1536 = vmatmul.bf16.gmra.mxu0 %v626
  %v1537 = vpop.f32.mrf.mxu0
  %v1538 = vadd.f32 %v1449, %v1537
  %v1539 = vpop.f32.mrf.mxu0
  %v1540 = vadd.f32 %v1451, %v1539
  %1541 = vmatmul.bf16.gmra.mxu0 %v631
  %v1542 = vpop.f32.mrf.mxu0
  %v1543 = vadd.f32 %v1454, %v1542
  %v1544 = vpop.f32.mrf.mxu0
  %v1545 = vadd.f32 %v1456, %v1544
  %1546 = vmatmul.bf16.gmra.mxu0 %v636
  %v1547 = vpop.f32.mrf.mxu0
  %v1548 = vadd.f32 %v1459, %v1547
  %v1549 = vpop.f32.mrf.mxu0
  %v1550 = vadd.f32 %v1461, %v1549
  %1551 = vmatmul.bf16.gmra.mxu0 %v641
  %v1552 = vpop.f32.mrf.mxu0
  %v1553 = vadd.f32 %v1464, %v1552
  %v1554 = vpop.f32.mrf.mxu0
  %v1555 = vadd.f32 %v1466, %v1554
  %1556 = vmatmul.bf16.gmra.mxu0 %v646
  %v1557 = vpop.f32.mrf.mxu0
  %v1558 = vadd.f32 %v1469, %v1557
  %v1559 = vpop.f32.mrf.mxu0
  %v1560 = vadd.f32 %v1471, %v1559
  %1561 = vdwg.mxu0
  %1562 = vmatpush.bf16.msra.mxu0 0
  %1563 = vmatpush.bf16.msra.mxu0 0
  %1564 = vmatpush.bf16.msra.mxu0 0
  %1565 = vmatpush.bf16.msra.mxu0 0
  %1566 = vmatpush.bf16.msra.mxu0 0
  %1567 = vmatpush.bf16.msra.mxu0 0
  %1568 = vmatpush.bf16.msra.mxu0 0
  %1569 = vmatpush.bf16.msra.mxu0 %v215
  %1570 = vmatmul.bf16.gmra.mxu0 %v714
  %v1571 = vpop.f32.mrf.mxu0
  %v1572 = vadd.f32 %v1483, %v1571
  %v1573 = vpop.f32.mrf.mxu0
  %v1574 = vadd.f32 %v1485, %v1573
  %1575 = vmatmul.bf16.gmra.mxu0 %v717
  %v1576 = vpop.f32.mrf.mxu0
  %v1577 = vadd.f32 %v1488, %v1576
  %v1578 = vpop.f32.mrf.mxu0
  %v1579 = vadd.f32 %v1490, %v1578
  %1580 = vmatmul.bf16.gmra.mxu0 %v720
  %v1581 = vpop.f32.mrf.mxu0
  %v1582 = vadd.f32 %v1493, %v1581
  %v1583 = vpop.f32.mrf.mxu0
  %v1584 = vadd.f32 %v1495, %v1583
  %1585 = vmatmul.bf16.gmra.mxu0 %v723
  %v1586 = vpop.f32.mrf.mxu0
  %v1587 = vadd.f32 %v1498, %v1586
  %v1588 = vpop.f32.mrf.mxu0
  %v1589 = vadd.f32 %v1500, %v1588
  %1590 = vmatmul.bf16.gmra.mxu0 %v726
  %v1591 = vpop.f32.mrf.mxu0
  %v1592 = vadd.f32 %v1503, %v1591
  %v1593 = vpop.f32.mrf.mxu0
  %v1594 = vadd.f32 %v1505, %v1593
  %1595 = vmatmul.bf16.gmra.mxu0 %v729
  %v1596 = vpop.f32.mrf.mxu0
  %v1597 = vadd.f32 %v1508, %v1596
  %v1598 = vpop.f32.mrf.mxu0
  %v1599 = vadd.f32 %v1510, %v1598
  %1600 = vmatmul.bf16.gmra.mxu0 %v732
  %v1601 = vpop.f32.mrf.mxu0
  %v1602 = vadd.f32 %v1513, %v1601
  %v1603 = vpop.f32.mrf.mxu0
  %v1604 = vadd.f32 %v1515, %v1603
  %1605 = vmatmul.bf16.gmra.mxu0 %v735
  %v1606 = vpop.f32.mrf.mxu0
  %v1607 = vadd.f32 %v1518, %v1606
  %v1608 = vpop.f32.mrf.mxu0
  %v1609 = vadd.f32 %v1520, %v1608
  %1610 = vmatmul.bf16.gmra.mxu0 %v738
  %v1611 = vpop.f32.mrf.mxu0
  %v1612 = vadd.f32 %v1523, %v1611
  %v1613 = vpop.f32.mrf.mxu0
  %v1614 = vadd.f32 %v1525, %v1613
  %1615 = vmatmul.bf16.gmra.mxu0 %v741
  %v1616 = vpop.f32.mrf.mxu0
  %v1617 = vadd.f32 %v1528, %v1616
  %v1618 = vpop.f32.mrf.mxu0
  %v1619 = vadd.f32 %v1530, %v1618
  %1620 = vmatmul.bf16.gmra.mxu0 %v744
  %v1621 = vpop.f32.mrf.mxu0
  %v1622 = vadd.f32 %v1533, %v1621
  %v1623 = vpop.f32.mrf.mxu0
  %v1624 = vadd.f32 %v1535, %v1623
  %1625 = vmatmul.bf16.gmra.mxu0 %v747
  %v1626 = vpop.f32.mrf.mxu0
  %v1627 = vadd.f32 %v1538, %v1626
  %v1628 = vpop.f32.mrf.mxu0
  %v1629 = vadd.f32 %v1540, %v1628
  %1630 = vmatmul.bf16.gmra.mxu0 %v750
  %v1631 = vpop.f32.mrf.mxu0
  %v1632 = vadd.f32 %v1543, %v1631
  %v1633 = vpop.f32.mrf.mxu0
  %v1634 = vadd.f32 %v1545, %v1633
  %1635 = vmatmul.bf16.gmra.mxu0 %v753
  %v1636 = vpop.f32.mrf.mxu0
  %v1637 = vadd.f32 %v1548, %v1636
  %v1638 = vpop.f32.mrf.mxu0
  %v1639 = vadd.f32 %v1550, %v1638
  %1640 = vmatmul.bf16.gmra.mxu0 %v756
  %v1641 = vpop.f32.mrf.mxu0
  %v1642 = vadd.f32 %v1553, %v1641
  %v1643 = vpop.f32.mrf.mxu0
  %v1644 = vadd.f32 %v1555, %v1643
  %1645 = vmatmul.bf16.gmra.mxu0 %v759
  %v1646 = vpop.f32.mrf.mxu0
  %v1647 = vadd.f32 %v1558, %v1646
  %v1648 = vpop.f32.mrf.mxu0
  %v1649 = vadd.f32 %v1560, %v1648
  %1650 = vdwg.mxu0
  %vm1651 = vcmask 556032
  %v1652 = vsel %vm1651, %v1572, 0.0
  %v1653 = vadd.f32 %v1127, %v1652
  %1654 = vadd.xlane.f32.xlu0 %v1653
  %v1655 = vpop.xlane.xlu0 %1654
  %v1656 = vsel %vm1651, %v1574, 0.0
  %v1657 = vadd.f32 %v1129, %v1656
  %1658 = vadd.xlane.f32.xlu0 %v1657
  %v1659 = vpop.xlane.xlu0 %1658
  %v1660 = vsel %vm1651, %v1577, 0.0
  %v1661 = vadd.f32 %v1132, %v1660
  %1662 = vadd.xlane.f32.xlu0 %v1661
  %v1663 = vpop.xlane.xlu0 %1662
  %v1664 = vsel %vm1651, %v1579, 0.0
  %v1665 = vadd.f32 %v1134, %v1664
  %1666 = vadd.xlane.f32.xlu0 %v1665
  %v1667 = vpop.xlane.xlu0 %1666
  %v1668 = vsel %vm1651, %v1582, 0.0
  %v1669 = vadd.f32 %v1137, %v1668
  %1670 = vadd.xlane.f32.xlu0 %v1669
  %v1671 = vpop.xlane.xlu0 %1670
  %v1672 = vsel %vm1651, %v1584, 0.0
  %v1673 = vadd.f32 %v1139, %v1672
  %1674 = vadd.xlane.f32.xlu0 %v1673
  %v1675 = vpop.xlane.xlu0 %1674
  %v1676 = vsel %vm1651, %v1587, 0.0
  %v1677 = vadd.f32 %v1142, %v1676
  %1678 = vadd.xlane.f32.xlu0 %v1677
  %v1679 = vpop.xlane.xlu0 %1678
  %v1680 = vsel %vm1651, %v1589, 0.0
  %v1681 = vadd.f32 %v1144, %v1680
  %1682 = vadd.xlane.f32.xlu0 %v1681
  %v1683 = vpop.xlane.xlu0 %1682
  %v1684 = vsel %vm1651, %v1592, 0.0
  %v1685 = vadd.f32 %v1147, %v1684
  %1686 = vadd.xlane.f32.xlu0 %v1685
  %v1687 = vpop.xlane.xlu0 %1686
  %v1688 = vsel %vm1651, %v1594, 0.0
  %v1689 = vadd.f32 %v1149, %v1688
  %1690 = vadd.xlane.f32.xlu0 %v1689
  %v1691 = vpop.xlane.xlu0 %1690
  %v1692 = vsel %vm1651, %v1597, 0.0
  %v1693 = vadd.f32 %v1152, %v1692
  %1694 = vadd.xlane.f32.xlu0 %v1693
  %v1695 = vpop.xlane.xlu0 %1694
  %v1696 = vsel %vm1651, %v1599, 0.0
  %v1697 = vadd.f32 %v1154, %v1696
  %1698 = vadd.xlane.f32.xlu0 %v1697
  %v1699 = vpop.xlane.xlu0 %1698
  %v1700 = vsel %vm1651, %v1602, 0.0
  %v1701 = vadd.f32 %v1157, %v1700
  %1702 = vadd.xlane.f32.xlu0 %v1701
  %v1703 = vpop.xlane.xlu0 %1702
  %v1704 = vsel %vm1651, %v1604, 0.0
  %v1705 = vadd.f32 %v1159, %v1704
  %1706 = vadd.xlane.f32.xlu0 %v1705
  %v1707 = vpop.xlane.xlu0 %1706
  %v1708 = vsel %vm1651, %v1607, 0.0
  %v1709 = vadd.f32 %v1162, %v1708
  %1710 = vadd.xlane.f32.xlu0 %v1709
  %v1711 = vpop.xlane.xlu0 %1710
  %v1712 = vsel %vm1651, %v1609, 0.0
  %v1713 = vadd.f32 %v1164, %v1712
  %1714 = vadd.xlane.f32.xlu0 %v1713
  %v1715 = vpop.xlane.xlu0 %1714
  %v1716 = vsel %vm1651, %v1612, 0.0
  %v1717 = vadd.f32 %v1167, %v1716
  %1718 = vadd.xlane.f32.xlu0 %v1717
  %v1719 = vpop.xlane.xlu0 %1718
  %v1720 = vsel %vm1651, %v1614, 0.0
  %v1721 = vadd.f32 %v1169, %v1720
  %1722 = vadd.xlane.f32.xlu0 %v1721
  %v1723 = vpop.xlane.xlu0 %1722
  %v1724 = vsel %vm1651, %v1617, 0.0
  %v1725 = vadd.f32 %v1172, %v1724
  %1726 = vadd.xlane.f32.xlu0 %v1725
  %v1727 = vpop.xlane.xlu0 %1726
  %v1728 = vsel %vm1651, %v1619, 0.0
  %v1729 = vadd.f32 %v1174, %v1728
  %1730 = vadd.xlane.f32.xlu0 %v1729
  %v1731 = vpop.xlane.xlu0 %1730
  %v1732 = vsel %vm1651, %v1622, 0.0
  %v1733 = vadd.f32 %v1177, %v1732
  %1734 = vadd.xlane.f32.xlu0 %v1733
  %v1735 = vpop.xlane.xlu0 %1734
  %v1736 = vsel %vm1651, %v1624, 0.0
  %v1737 = vadd.f32 %v1179, %v1736
  %1738 = vadd.xlane.f32.xlu0 %v1737
  %v1739 = vpop.xlane.xlu0 %1738
  %v1740 = vsel %vm1651, %v1627, 0.0
  %v1741 = vadd.f32 %v1182, %v1740
  %1742 = vadd.xlane.f32.xlu0 %v1741
  %v1743 = vpop.xlane.xlu0 %1742
  %v1744 = vsel %vm1651, %v1629, 0.0
  %v1745 = vadd.f32 %v1184, %v1744
  %1746 = vadd.xlane.f32.xlu0 %v1745
  %v1747 = vpop.xlane.xlu0 %1746
  %v1748 = vsel %vm1651, %v1632, 0.0
  %v1749 = vadd.f32 %v1187, %v1748
  %1750 = vadd.xlane.f32.xlu0 %v1749
  %v1751 = vpop.xlane.xlu0 %1750
  %v1752 = vsel %vm1651, %v1634, 0.0
  %v1753 = vadd.f32 %v1189, %v1752
  %1754 = vadd.xlane.f32.xlu0 %v1753
  %v1755 = vpop.xlane.xlu0 %1754
  %v1756 = vsel %vm1651, %v1637, 0.0
  %v1757 = vadd.f32 %v1192, %v1756
  %1758 = vadd.xlane.f32.xlu0 %v1757
  %v1759 = vpop.xlane.xlu0 %1758
  %v1760 = vsel %vm1651, %v1639, 0.0
  %v1761 = vadd.f32 %v1194, %v1760
  %1762 = vadd.xlane.f32.xlu0 %v1761
  %v1763 = vpop.xlane.xlu0 %1762
  %v1764 = vsel %vm1651, %v1642, 0.0
  %v1765 = vadd.f32 %v1197, %v1764
  %1766 = vadd.xlane.f32.xlu0 %v1765
  %v1767 = vpop.xlane.xlu0 %1766
  %v1768 = vsel %vm1651, %v1644, 0.0
  %v1769 = vadd.f32 %v1199, %v1768
  %1770 = vadd.xlane.f32.xlu0 %v1769
  %v1771 = vpop.xlane.xlu0 %1770
  %v1772 = vsel %vm1651, %v1647, 0.0
  %v1773 = vadd.f32 %v1202, %v1772
  %1774 = vadd.xlane.f32.xlu0 %v1773
  %v1775 = vpop.xlane.xlu0 %1774
  %v1776 = vsel %vm1651, %v1649, 0.0
  %v1777 = vadd.f32 %v1204, %v1776
  %1778 = vadd.xlane.f32.xlu0 %v1777
  %v1779 = vpop.xlane.xlu0 %1778
  %v1780 = vmul.f32 %v1655, 0.0051020407
  %v1781 = vmul.f32 %v1659, 0.0051020407
  %v1782 = vmul.f32 %v1663, 0.0051020407
  %v1783 = vmul.f32 %v1667, 0.0051020407
  %v1784 = vmul.f32 %v1671, 0.0051020407
  %v1785 = vmul.f32 %v1675, 0.0051020407
  %v1786 = vmul.f32 %v1679, 0.0051020407
  %v1787 = vmul.f32 %v1683, 0.0051020407
  %v1788 = vmul.f32 %v1687, 0.0051020407
  %v1789 = vmul.f32 %v1691, 0.0051020407
  %v1790 = vmul.f32 %v1695, 0.0051020407
  %v1791 = vmul.f32 %v1699, 0.0051020407
  %v1792 = vmul.f32 %v1703, 0.0051020407
  %v1793 = vmul.f32 %v1707, 0.0051020407
  %v1794 = vmul.f32 %v1711, 0.0051020407
  %v1795 = vmul.f32 %v1715, 0.0051020407
  %v1796 = vmul.f32 %v1719, 0.0051020407
  %v1797 = vmul.f32 %v1723, 0.0051020407
  %v1798 = vmul.f32 %v1727, 0.0051020407
  %v1799 = vmul.f32 %v1731, 0.0051020407
  %v1800 = vmul.f32 %v1735, 0.0051020407
  %v1801 = vmul.f32 %v1739, 0.0051020407
  %v1802 = vmul.f32 %v1743, 0.0051020407
  %v1803 = vmul.f32 %v1747, 0.0051020407
  %v1804 = vmul.f32 %v1751, 0.0051020407
  %v1805 = vmul.f32 %v1755, 0.0051020407
  %v1806 = vmul.f32 %v1759, 0.0051020407
  %v1807 = vmul.f32 %v1763, 0.0051020407
  %v1808 = vmul.f32 %v1767, 0.0051020407
  %v1809 = vmul.f32 %v1771, 0.0051020407
  %v1810 = vmul.f32 %v1775, 0.0051020407
  %v1811 = vmul.f32 %v1779, 0.0051020407
  %v1812 = vmul.f32 %v1127, %v1127
  %v1813 = vmul.f32 %v1572, %v1572
  %v1814 = vmul.f32 %v1129, %v1129
  %v1815 = vmul.f32 %v1574, %v1574
  %v1816 = vmul.f32 %v1132, %v1132
  %v1817 = vmul.f32 %v1577, %v1577
  %v1818 = vmul.f32 %v1134, %v1134
  %v1819 = vmul.f32 %v1579, %v1579
  %v1820 = vmul.f32 %v1137, %v1137
  %v1821 = vmul.f32 %v1582, %v1582
  %v1822 = vmul.f32 %v1139, %v1139
  %v1823 = vmul.f32 %v1584, %v1584
  %v1824 = vmul.f32 %v1142, %v1142
  %v1825 = vmul.f32 %v1587, %v1587
  %v1826 = vmul.f32 %v1144, %v1144
  %v1827 = vmul.f32 %v1589, %v1589
  %v1828 = vmul.f32 %v1147, %v1147
  %v1829 = vmul.f32 %v1592, %v1592
  %v1830 = vmul.f32 %v1149, %v1149
  %v1831 = vmul.f32 %v1594, %v1594
  %v1832 = vmul.f32 %v1152, %v1152
  %v1833 = vmul.f32 %v1597, %v1597
  %v1834 = vmul.f32 %v1154, %v1154
  %v1835 = vmul.f32 %v1599, %v1599
  %v1836 = vmul.f32 %v1157, %v1157
  %v1837 = vmul.f32 %v1602, %v1602
  %v1838 = vmul.f32 %v1159, %v1159
  %v1839 = vmul.f32 %v1604, %v1604
  %v1840 = vmul.f32 %v1162, %v1162
  %v1841 = vmul.f32 %v1607, %v1607
  %v1842 = vmul.f32 %v1164, %v1164
  %v1843 = vmul.f32 %v1609, %v1609
  %v1844 = vmul.f32 %v1167, %v1167
  %v1845 = vmul.f32 %v1612, %v1612
  %v1846 = vmul.f32 %v1169, %v1169
  %v1847 = vmul.f32 %v1614, %v1614
  %v1848 = vmul.f32 %v1172, %v1172
  %v1849 = vmul.f32 %v1617, %v1617
  %v1850 = vmul.f32 %v1174, %v1174
  %v1851 = vmul.f32 %v1619, %v1619
  %v1852 = vmul.f32 %v1177, %v1177
  %v1853 = vmul.f32 %v1622, %v1622
  %v1854 = vmul.f32 %v1179, %v1179
  %v1855 = vmul.f32 %v1624, %v1624
  %v1856 = vmul.f32 %v1182, %v1182
  %v1857 = vmul.f32 %v1627, %v1627
  %v1858 = vmul.f32 %v1184, %v1184
  %v1859 = vmul.f32 %v1629, %v1629
  %v1860 = vmul.f32 %v1187, %v1187
  %v1861 = vmul.f32 %v1632, %v1632
  %v1862 = vmul.f32 %v1189, %v1189
  %v1863 = vmul.f32 %v1634, %v1634
  %v1864 = vmul.f32 %v1192, %v1192
  %v1865 = vmul.f32 %v1637, %v1637
  %v1866 = vmul.f32 %v1194, %v1194
  %v1867 = vmul.f32 %v1639, %v1639
  %v1868 = vmul.f32 %v1197, %v1197
  %v1869 = vmul.f32 %v1642, %v1642
  %v1870 = vmul.f32 %v1199, %v1199
  %v1871 = vmul.f32 %v1644, %v1644
  %v1872 = vmul.f32 %v1202, %v1202
  %v1873 = vmul.f32 %v1647, %v1647
  %v1874 = vmul.f32 %v1204, %v1204
  %v1875 = vmul.f32 %v1649, %v1649
  %v1876 = vsel %vm1651, %v1813, 0.0
  %v1877 = vadd.f32 %v1812, %v1876
  %1878 = vadd.xlane.f32.xlu0 %v1877
  %v1879 = vpop.xlane.xlu0 %1878
  %v1880 = vsel %vm1651, %v1815, 0.0
  %v1881 = vadd.f32 %v1814, %v1880
  %1882 = vadd.xlane.f32.xlu0 %v1881
  %v1883 = vpop.xlane.xlu0 %1882
  %v1884 = vsel %vm1651, %v1817, 0.0
  %v1885 = vadd.f32 %v1816, %v1884
  %1886 = vadd.xlane.f32.xlu0 %v1885
  %v1887 = vpop.xlane.xlu0 %1886
  %v1888 = vsel %vm1651, %v1819, 0.0
  %v1889 = vadd.f32 %v1818, %v1888
  %1890 = vadd.xlane.f32.xlu0 %v1889
  %v1891 = vpop.xlane.xlu0 %1890
  %v1892 = vsel %vm1651, %v1821, 0.0
  %v1893 = vadd.f32 %v1820, %v1892
  %1894 = vadd.xlane.f32.xlu0 %v1893
  %v1895 = vpop.xlane.xlu0 %1894
  %v1896 = vsel %vm1651, %v1823, 0.0
  %v1897 = vadd.f32 %v1822, %v1896
  %1898 = vadd.xlane.f32.xlu0 %v1897
  %v1899 = vpop.xlane.xlu0 %1898
  %v1900 = vsel %vm1651, %v1825, 0.0
  %v1901 = vadd.f32 %v1824, %v1900
  %1902 = vadd.xlane.f32.xlu0 %v1901
  %v1903 = vpop.xlane.xlu0 %1902
  %v1904 = vsel %vm1651, %v1827, 0.0
  %v1905 = vadd.f32 %v1826, %v1904
  %1906 = vadd.xlane.f32.xlu0 %v1905
  %v1907 = vpop.xlane.xlu0 %1906
  %v1908 = vsel %vm1651, %v1829, 0.0
  %v1909 = vadd.f32 %v1828, %v1908
  %1910 = vadd.xlane.f32.xlu0 %v1909
  %v1911 = vpop.xlane.xlu0 %1910
  %v1912 = vsel %vm1651, %v1831, 0.0
  %v1913 = vadd.f32 %v1830, %v1912
  %1914 = vadd.xlane.f32.xlu0 %v1913
  %v1915 = vpop.xlane.xlu0 %1914
  %v1916 = vsel %vm1651, %v1833, 0.0
  %v1917 = vadd.f32 %v1832, %v1916
  %1918 = vadd.xlane.f32.xlu0 %v1917
  %v1919 = vpop.xlane.xlu0 %1918
  %v1920 = vsel %vm1651, %v1835, 0.0
  %v1921 = vadd.f32 %v1834, %v1920
  %1922 = vadd.xlane.f32.xlu0 %v1921
  %v1923 = vpop.xlane.xlu0 %1922
  %v1924 = vsel %vm1651, %v1837, 0.0
  %v1925 = vadd.f32 %v1836, %v1924
  %1926 = vadd.xlane.f32.xlu0 %v1925
  %v1927 = vpop.xlane.xlu0 %1926
  %v1928 = vsel %vm1651, %v1839, 0.0
  %v1929 = vadd.f32 %v1838, %v1928
  %1930 = vadd.xlane.f32.xlu0 %v1929
  %v1931 = vpop.xlane.xlu0 %1930
  %v1932 = vsel %vm1651, %v1841, 0.0
  %v1933 = vadd.f32 %v1840, %v1932
  %1934 = vadd.xlane.f32.xlu0 %v1933
  %v1935 = vpop.xlane.xlu0 %1934
  %v1936 = vsel %vm1651, %v1843, 0.0
  %v1937 = vadd.f32 %v1842, %v1936
  %1938 = vadd.xlane.f32.xlu0 %v1937
  %v1939 = vpop.xlane.xlu0 %1938
  %v1940 = vsel %vm1651, %v1845, 0.0
  %v1941 = vadd.f32 %v1844, %v1940
  %1942 = vadd.xlane.f32.xlu0 %v1941
  %v1943 = vpop.xlane.xlu0 %1942
  %v1944 = vsel %vm1651, %v1847, 0.0
  %v1945 = vadd.f32 %v1846, %v1944
  %1946 = vadd.xlane.f32.xlu0 %v1945
  %v1947 = vpop.xlane.xlu0 %1946
  %v1948 = vsel %vm1651, %v1849, 0.0
  %v1949 = vadd.f32 %v1848, %v1948
  %1950 = vadd.xlane.f32.xlu0 %v1949
  %v1951 = vpop.xlane.xlu0 %1950
  %v1952 = vsel %vm1651, %v1851, 0.0
  %v1953 = vadd.f32 %v1850, %v1952
  %1954 = vadd.xlane.f32.xlu0 %v1953
  %v1955 = vpop.xlane.xlu0 %1954
  %v1956 = vsel %vm1651, %v1853, 0.0
  %v1957 = vadd.f32 %v1852, %v1956
  %1958 = vadd.xlane.f32.xlu0 %v1957
  %v1959 = vpop.xlane.xlu0 %1958
  %v1960 = vsel %vm1651, %v1855, 0.0
  %v1961 = vadd.f32 %v1854, %v1960
  %1962 = vadd.xlane.f32.xlu0 %v1961
  %v1963 = vpop.xlane.xlu0 %1962
  %v1964 = vsel %vm1651, %v1857, 0.0
  %v1965 = vadd.f32 %v1856, %v1964
  %1966 = vadd.xlane.f32.xlu0 %v1965
  %v1967 = vpop.xlane.xlu0 %1966
  %v1968 = vsel %vm1651, %v1859, 0.0
  %v1969 = vadd.f32 %v1858, %v1968
  %1970 = vadd.xlane.f32.xlu0 %v1969
  %v1971 = vpop.xlane.xlu0 %1970
  %v1972 = vsel %vm1651, %v1861, 0.0
  %v1973 = vadd.f32 %v1860, %v1972
  %1974 = vadd.xlane.f32.xlu0 %v1973
  %v1975 = vpop.xlane.xlu0 %1974
  %v1976 = vsel %vm1651, %v1863, 0.0
  %v1977 = vadd.f32 %v1862, %v1976
  %1978 = vadd.xlane.f32.xlu0 %v1977
  %v1979 = vpop.xlane.xlu0 %1978
  %v1980 = vsel %vm1651, %v1865, 0.0
  %v1981 = vadd.f32 %v1864, %v1980
  %1982 = vadd.xlane.f32.xlu0 %v1981
  %v1983 = vpop.xlane.xlu0 %1982
  %v1984 = vsel %vm1651, %v1867, 0.0
  %v1985 = vadd.f32 %v1866, %v1984
  %1986 = vadd.xlane.f32.xlu0 %v1985
  %v1987 = vpop.xlane.xlu0 %1986
  %v1988 = vsel %vm1651, %v1869, 0.0
  %v1989 = vadd.f32 %v1868, %v1988
  %1990 = vadd.xlane.f32.xlu0 %v1989
  %v1991 = vpop.xlane.xlu0 %1990
  %v1992 = vsel %vm1651, %v1871, 0.0
  %v1993 = vadd.f32 %v1870, %v1992
  %1994 = vadd.xlane.f32.xlu0 %v1993
  %v1995 = vpop.xlane.xlu0 %1994
  %v1996 = vsel %vm1651, %v1873, 0.0
  %v1997 = vadd.f32 %v1872, %v1996
  %1998 = vadd.xlane.f32.xlu0 %v1997
  %v1999 = vpop.xlane.xlu0 %1998
  %v2000 = vsel %vm1651, %v1875, 0.0
  %v2001 = vadd.f32 %v1874, %v2000
  %2002 = vadd.xlane.f32.xlu0 %v2001
  %v2003 = vpop.xlane.xlu0 %2002
  %v2004 = vmul.f32 %v1879, 0.0051020407
  %v2005 = vmul.f32 %v1883, 0.0051020407
  %v2006 = vmul.f32 %v1887, 0.0051020407
  %v2007 = vmul.f32 %v1891, 0.0051020407
  %v2008 = vmul.f32 %v1895, 0.0051020407
  %v2009 = vmul.f32 %v1899, 0.0051020407
  %v2010 = vmul.f32 %v1903, 0.0051020407
  %v2011 = vmul.f32 %v1907, 0.0051020407
  %v2012 = vmul.f32 %v1911, 0.0051020407
  %v2013 = vmul.f32 %v1915, 0.0051020407
  %v2014 = vmul.f32 %v1919, 0.0051020407
  %v2015 = vmul.f32 %v1923, 0.0051020407
  %v2016 = vmul.f32 %v1927, 0.0051020407
  %v2017 = vmul.f32 %v1931, 0.0051020407
  %v2018 = vmul.f32 %v1935, 0.0051020407
  %v2019 = vmul.f32 %v1939, 0.0051020407
  %v2020 = vmul.f32 %v1943, 0.0051020407
  %v2021 = vmul.f32 %v1947, 0.0051020407
  %v2022 = vmul.f32 %v1951, 0.0051020407
  %v2023 = vmul.f32 %v1955, 0.0051020407
  %v2024 = vmul.f32 %v1959, 0.0051020407
  %v2025 = vmul.f32 %v1963, 0.0051020407
  %v2026 = vmul.f32 %v1967, 0.0051020407
  %v2027 = vmul.f32 %v1971, 0.0051020407
  %v2028 = vmul.f32 %v1975, 0.0051020407
  %v2029 = vmul.f32 %v1979, 0.0051020407
  %v2030 = vmul.f32 %v1983, 0.0051020407
  %v2031 = vmul.f32 %v1987, 0.0051020407
  %v2032 = vmul.f32 %v1991, 0.0051020407
  %v2033 = vmul.f32 %v1995, 0.0051020407
  %v2034 = vmul.f32 %v1999, 0.0051020407
  %v2035 = vmul.f32 %v2003, 0.0051020407
  %v2036 = vmul.f32 %v1780, %v1780
  %v2037 = vmul.f32 %v1781, %v1781
  %v2038 = vmul.f32 %v1782, %v1782
  %v2039 = vmul.f32 %v1783, %v1783
  %v2040 = vmul.f32 %v1784, %v1784
  %v2041 = vmul.f32 %v1785, %v1785
  %v2042 = vmul.f32 %v1786, %v1786
  %v2043 = vmul.f32 %v1787, %v1787
  %v2044 = vmul.f32 %v1788, %v1788
  %v2045 = vmul.f32 %v1789, %v1789
  %v2046 = vmul.f32 %v1790, %v1790
  %v2047 = vmul.f32 %v1791, %v1791
  %v2048 = vmul.f32 %v1792, %v1792
  %v2049 = vmul.f32 %v1793, %v1793
  %v2050 = vmul.f32 %v1794, %v1794
  %v2051 = vmul.f32 %v1795, %v1795
  %v2052 = vmul.f32 %v1796, %v1796
  %v2053 = vmul.f32 %v1797, %v1797
  %v2054 = vmul.f32 %v1798, %v1798
  %v2055 = vmul.f32 %v1799, %v1799
  %v2056 = vmul.f32 %v1800, %v1800
  %v2057 = vmul.f32 %v1801, %v1801
  %v2058 = vmul.f32 %v1802, %v1802
  %v2059 = vmul.f32 %v1803, %v1803
  %v2060 = vmul.f32 %v1804, %v1804
  %v2061 = vmul.f32 %v1805, %v1805
  %v2062 = vmul.f32 %v1806, %v1806
  %v2063 = vmul.f32 %v1807, %v1807
  %v2064 = vmul.f32 %v1808, %v1808
  %v2065 = vmul.f32 %v1809, %v1809
  %v2066 = vmul.f32 %v1810, %v1810
  %v2067 = vmul.f32 %v1811, %v1811
  %v2068 = vsub.f32 %v2004, %v2036
  %v2069 = vsub.f32 %v2005, %v2037
  %v2070 = vsub.f32 %v2006, %v2038
  %v2071 = vsub.f32 %v2007, %v2039
  %v2072 = vsub.f32 %v2008, %v2040
  %v2073 = vsub.f32 %v2009, %v2041
  %v2074 = vsub.f32 %v2010, %v2042
  %v2075 = vsub.f32 %v2011, %v2043
  %v2076 = vsub.f32 %v2012, %v2044
  %v2077 = vsub.f32 %v2013, %v2045
  %v2078 = vsub.f32 %v2014, %v2046
  %v2079 = vsub.f32 %v2015, %v2047
  %v2080 = vsub.f32 %v2016, %v2048
  %v2081 = vsub.f32 %v2017, %v2049
  %v2082 = vsub.f32 %v2018, %v2050
  %v2083 = vsub.f32 %v2019, %v2051
  %v2084 = vsub.f32 %v2020, %v2052
  %v2085 = vsub.f32 %v2021, %v2053
  %v2086 = vsub.f32 %v2022, %v2054
  %v2087 = vsub.f32 %v2023, %v2055
  %v2088 = vsub.f32 %v2024, %v2056
  %v2089 = vsub.f32 %v2025, %v2057
  %v2090 = vsub.f32 %v2026, %v2058
  %v2091 = vsub.f32 %v2027, %v2059
  %v2092 = vsub.f32 %v2028, %v2060
  %v2093 = vsub.f32 %v2029, %v2061
  %v2094 = vsub.f32 %v2030, %v2062
  %v2095 = vsub.f32 %v2031, %v2063
  %v2096 = vsub.f32 %v2032, %v2064
  %v2097 = vsub.f32 %v2033, %v2065
  %v2098 = vsub.f32 %v2034, %v2066
  %v2099 = vsub.f32 %v2035, %v2067
  %v2100 = vmax.f32 %v2068, 0.0
  %v2101 = vmax.f32 %v2069, 0.0
  %v2102 = vmax.f32 %v2070, 0.0
  %v2103 = vmax.f32 %v2071, 0.0
  %v2104 = vmax.f32 %v2072, 0.0
  %v2105 = vmax.f32 %v2073, 0.0
  %v2106 = vmax.f32 %v2074, 0.0
  %v2107 = vmax.f32 %v2075, 0.0
  %v2108 = vmax.f32 %v2076, 0.0
  %v2109 = vmax.f32 %v2077, 0.0
  %v2110 = vmax.f32 %v2078, 0.0
  %v2111 = vmax.f32 %v2079, 0.0
  %v2112 = vmax.f32 %v2080, 0.0
  %v2113 = vmax.f32 %v2081, 0.0
  %v2114 = vmax.f32 %v2082, 0.0
  %v2115 = vmax.f32 %v2083, 0.0
  %v2116 = vmax.f32 %v2084, 0.0
  %v2117 = vmax.f32 %v2085, 0.0
  %v2118 = vmax.f32 %v2086, 0.0
  %v2119 = vmax.f32 %v2087, 0.0
  %v2120 = vmax.f32 %v2088, 0.0
  %v2121 = vmax.f32 %v2089, 0.0
  %v2122 = vmax.f32 %v2090, 0.0
  %v2123 = vmax.f32 %v2091, 0.0
  %v2124 = vmax.f32 %v2092, 0.0
  %v2125 = vmax.f32 %v2093, 0.0
  %v2126 = vmax.f32 %v2094, 0.0
  %v2127 = vmax.f32 %v2095, 0.0
  %v2128 = vmax.f32 %v2096, 0.0
  %v2129 = vmax.f32 %v2097, 0.0
  %v2130 = vmax.f32 %v2098, 0.0
  %v2131 = vmax.f32 %v2099, 0.0
  %v2132 = vadd.f32 %v2100, 0.001
  %v2133 = vadd.f32 %v2101, 0.001
  %v2134 = vadd.f32 %v2102, 0.001
  %v2135 = vadd.f32 %v2103, 0.001
  %v2136 = vadd.f32 %v2104, 0.001
  %v2137 = vadd.f32 %v2105, 0.001
  %v2138 = vadd.f32 %v2106, 0.001
  %v2139 = vadd.f32 %v2107, 0.001
  %v2140 = vadd.f32 %v2108, 0.001
  %v2141 = vadd.f32 %v2109, 0.001
  %v2142 = vadd.f32 %v2110, 0.001
  %v2143 = vadd.f32 %v2111, 0.001
  %v2144 = vadd.f32 %v2112, 0.001
  %v2145 = vadd.f32 %v2113, 0.001
  %v2146 = vadd.f32 %v2114, 0.001
  %v2147 = vadd.f32 %v2115, 0.001
  %v2148 = vadd.f32 %v2116, 0.001
  %v2149 = vadd.f32 %v2117, 0.001
  %v2150 = vadd.f32 %v2118, 0.001
  %v2151 = vadd.f32 %v2119, 0.001
  %v2152 = vadd.f32 %v2120, 0.001
  %v2153 = vadd.f32 %v2121, 0.001
  %v2154 = vadd.f32 %v2122, 0.001
  %v2155 = vadd.f32 %v2123, 0.001
  %v2156 = vadd.f32 %v2124, 0.001
  %v2157 = vadd.f32 %v2125, 0.001
  %v2158 = vadd.f32 %v2126, 0.001
  %v2159 = vadd.f32 %v2127, 0.001
  %v2160 = vadd.f32 %v2128, 0.001
  %v2161 = vadd.f32 %v2129, 0.001
  %v2162 = vadd.f32 %v2130, 0.001
  %v2163 = vadd.f32 %v2131, 0.001
  %v2164 = vrsqrt.pop %v2132
  %v2165 = vmul.f32 %v2164, %v2132
  %v2166 = vmul.f32 %v2165, %v2164
  %v2167 = vmul.f32 0.5, %v2166
  %v2168 = vsub.f32 1.5, %v2167
  %v2169 = vmul.f32 %v2164, %v2168
  %vm2170 = vweird.f32 %v2132
  %vm2171 = vweird.f32 %v2164
  %vm2172 = vmor %vm2170, %vm2171
  %v2173 = vsel %vm2172, %v2164, %v2169
  %v2174 = vrsqrt.pop %v2133
  %v2175 = vmul.f32 %v2174, %v2133
  %v2176 = vmul.f32 %v2175, %v2174
  %v2177 = vmul.f32 0.5, %v2176
  %v2178 = vsub.f32 1.5, %v2177
  %v2179 = vmul.f32 %v2174, %v2178
  %vm2180 = vweird.f32 %v2133
  %vm2181 = vweird.f32 %v2174
  %vm2182 = vmor %vm2180, %vm2181
  %v2183 = vsel %vm2182, %v2174, %v2179
  %v2184 = vrsqrt.pop %v2134
  %v2185 = vmul.f32 %v2184, %v2134
  %v2186 = vmul.f32 %v2185, %v2184
  %v2187 = vmul.f32 0.5, %v2186
  %v2188 = vsub.f32 1.5, %v2187
  %v2189 = vmul.f32 %v2184, %v2188
  %vm2190 = vweird.f32 %v2134
  %vm2191 = vweird.f32 %v2184
  %vm2192 = vmor %vm2190, %vm2191
  %v2193 = vsel %vm2192, %v2184, %v2189
  %v2194 = vrsqrt.pop %v2135
  %v2195 = vmul.f32 %v2194, %v2135
  %v2196 = vmul.f32 %v2195, %v2194
  %v2197 = vmul.f32 0.5, %v2196
  %v2198 = vsub.f32 1.5, %v2197
  %v2199 = vmul.f32 %v2194, %v2198
  %vm2200 = vweird.f32 %v2135
  %vm2201 = vweird.f32 %v2194
  %vm2202 = vmor %vm2200, %vm2201
  %v2203 = vsel %vm2202, %v2194, %v2199
  %v2204 = vrsqrt.pop %v2136
  %v2205 = vmul.f32 %v2204, %v2136
  %v2206 = vmul.f32 %v2205, %v2204
  %v2207 = vmul.f32 0.5, %v2206
  %v2208 = vsub.f32 1.5, %v2207
  %v2209 = vmul.f32 %v2204, %v2208
  %vm2210 = vweird.f32 %v2136
  %vm2211 = vweird.f32 %v2204
  %vm2212 = vmor %vm2210, %vm2211
  %v2213 = vsel %vm2212, %v2204, %v2209
  %v2214 = vrsqrt.pop %v2137
  %v2215 = vmul.f32 %v2214, %v2137
  %v2216 = vmul.f32 %v2215, %v2214
  %v2217 = vmul.f32 0.5, %v2216
  %v2218 = vsub.f32 1.5, %v2217
  %v2219 = vmul.f32 %v2214, %v2218
  %vm2220 = vweird.f32 %v2137
  %vm2221 = vweird.f32 %v2214
  %vm2222 = vmor %vm2220, %vm2221
  %v2223 = vsel %vm2222, %v2214, %v2219
  %v2224 = vrsqrt.pop %v2138
  %v2225 = vmul.f32 %v2224, %v2138
  %v2226 = vmul.f32 %v2225, %v2224
  %v2227 = vmul.f32 0.5, %v2226
  %v2228 = vsub.f32 1.5, %v2227
  %v2229 = vmul.f32 %v2224, %v2228
  %vm2230 = vweird.f32 %v2138
  %vm2231 = vweird.f32 %v2224
  %vm2232 = vmor %vm2230, %vm2231
  %v2233 = vsel %vm2232, %v2224, %v2229
  %v2234 = vrsqrt.pop %v2139
  %v2235 = vmul.f32 %v2234, %v2139
  %v2236 = vmul.f32 %v2235, %v2234
  %v2237 = vmul.f32 0.5, %v2236
  %v2238 = vsub.f32 1.5, %v2237
  %v2239 = vmul.f32 %v2234, %v2238
  %vm2240 = vweird.f32 %v2139
  %vm2241 = vweird.f32 %v2234
  %vm2242 = vmor %vm2240, %vm2241
  %v2243 = vsel %vm2242, %v2234, %v2239
  %v2244 = vrsqrt.pop %v2140
  %v2245 = vmul.f32 %v2244, %v2140
  %v2246 = vmul.f32 %v2245, %v2244
  %v2247 = vmul.f32 0.5, %v2246
  %v2248 = vsub.f32 1.5, %v2247
  %v2249 = vmul.f32 %v2244, %v2248
  %vm2250 = vweird.f32 %v2140
  %vm2251 = vweird.f32 %v2244
  %vm2252 = vmor %vm2250, %vm2251
  %v2253 = vsel %vm2252, %v2244, %v2249
  %v2254 = vrsqrt.pop %v2141
  %v2255 = vmul.f32 %v2254, %v2141
  %v2256 = vmul.f32 %v2255, %v2254
  %v2257 = vmul.f32 0.5, %v2256
  %v2258 = vsub.f32 1.5, %v2257
  %v2259 = vmul.f32 %v2254, %v2258
  %vm2260 = vweird.f32 %v2141
  %vm2261 = vweird.f32 %v2254
  %vm2262 = vmor %vm2260, %vm2261
  %v2263 = vsel %vm2262, %v2254, %v2259
  %v2264 = vrsqrt.pop %v2142
  %v2265 = vmul.f32 %v2264, %v2142
  %v2266 = vmul.f32 %v2265, %v2264
  %v2267 = vmul.f32 0.5, %v2266
  %v2268 = vsub.f32 1.5, %v2267
  %v2269 = vmul.f32 %v2264, %v2268
  %vm2270 = vweird.f32 %v2142
  %vm2271 = vweird.f32 %v2264
  %vm2272 = vmor %vm2270, %vm2271
  %v2273 = vsel %vm2272, %v2264, %v2269
  %v2274 = vrsqrt.pop %v2143
  %v2275 = vmul.f32 %v2274, %v2143
  %v2276 = vmul.f32 %v2275, %v2274
  %v2277 = vmul.f32 0.5, %v2276
  %v2278 = vsub.f32 1.5, %v2277
  %v2279 = vmul.f32 %v2274, %v2278
  %vm2280 = vweird.f32 %v2143
  %vm2281 = vweird.f32 %v2274
  %vm2282 = vmor %vm2280, %vm2281
  %v2283 = vsel %vm2282, %v2274, %v2279
  %v2284 = vrsqrt.pop %v2144
  %v2285 = vmul.f32 %v2284, %v2144
  %v2286 = vmul.f32 %v2285, %v2284
  %v2287 = vmul.f32 0.5, %v2286
  %v2288 = vsub.f32 1.5, %v2287
  %v2289 = vmul.f32 %v2284, %v2288
  %vm2290 = vweird.f32 %v2144
  %vm2291 = vweird.f32 %v2284
  %vm2292 = vmor %vm2290, %vm2291
  %v2293 = vsel %vm2292, %v2284, %v2289
  %v2294 = vrsqrt.pop %v2145
  %v2295 = vmul.f32 %v2294, %v2145
  %v2296 = vmul.f32 %v2295, %v2294
  %v2297 = vmul.f32 0.5, %v2296
  %v2298 = vsub.f32 1.5, %v2297
  %v2299 = vmul.f32 %v2294, %v2298
  %vm2300 = vweird.f32 %v2145
  %vm2301 = vweird.f32 %v2294
  %vm2302 = vmor %vm2300, %vm2301
  %v2303 = vsel %vm2302, %v2294, %v2299
  %v2304 = vrsqrt.pop %v2146
  %v2305 = vmul.f32 %v2304, %v2146
  %v2306 = vmul.f32 %v2305, %v2304
  %v2307 = vmul.f32 0.5, %v2306
  %v2308 = vsub.f32 1.5, %v2307
  %v2309 = vmul.f32 %v2304, %v2308
  %vm2310 = vweird.f32 %v2146
  %vm2311 = vweird.f32 %v2304
  %vm2312 = vmor %vm2310, %vm2311
  %v2313 = vsel %vm2312, %v2304, %v2309
  %v2314 = vrsqrt.pop %v2147
  %v2315 = vmul.f32 %v2314, %v2147
  %v2316 = vmul.f32 %v2315, %v2314
  %v2317 = vmul.f32 0.5, %v2316
  %v2318 = vsub.f32 1.5, %v2317
  %v2319 = vmul.f32 %v2314, %v2318
  %vm2320 = vweird.f32 %v2147
  %vm2321 = vweird.f32 %v2314
  %vm2322 = vmor %vm2320, %vm2321
  %v2323 = vsel %vm2322, %v2314, %v2319
  %v2324 = vrsqrt.pop %v2148
  %v2325 = vmul.f32 %v2324, %v2148
  %v2326 = vmul.f32 %v2325, %v2324
  %v2327 = vmul.f32 0.5, %v2326
  %v2328 = vsub.f32 1.5, %v2327
  %v2329 = vmul.f32 %v2324, %v2328
  %vm2330 = vweird.f32 %v2148
  %vm2331 = vweird.f32 %v2324
  %vm2332 = vmor %vm2330, %vm2331
  %v2333 = vsel %vm2332, %v2324, %v2329
  %v2334 = vrsqrt.pop %v2149
  %v2335 = vmul.f32 %v2334, %v2149
  %v2336 = vmul.f32 %v2335, %v2334
  %v2337 = vmul.f32 0.5, %v2336
  %v2338 = vsub.f32 1.5, %v2337
  %v2339 = vmul.f32 %v2334, %v2338
  %vm2340 = vweird.f32 %v2149
  %vm2341 = vweird.f32 %v2334
  %vm2342 = vmor %vm2340, %vm2341
  %v2343 = vsel %vm2342, %v2334, %v2339
  %v2344 = vrsqrt.pop %v2150
  %v2345 = vmul.f32 %v2344, %v2150
  %v2346 = vmul.f32 %v2345, %v2344
  %v2347 = vmul.f32 0.5, %v2346
  %v2348 = vsub.f32 1.5, %v2347
  %v2349 = vmul.f32 %v2344, %v2348
  %vm2350 = vweird.f32 %v2150
  %vm2351 = vweird.f32 %v2344
  %vm2352 = vmor %vm2350, %vm2351
  %v2353 = vsel %vm2352, %v2344, %v2349
  %v2354 = vrsqrt.pop %v2151
  %v2355 = vmul.f32 %v2354, %v2151
  %v2356 = vmul.f32 %v2355, %v2354
  %v2357 = vmul.f32 0.5, %v2356
  %v2358 = vsub.f32 1.5, %v2357
  %v2359 = vmul.f32 %v2354, %v2358
  %vm2360 = vweird.f32 %v2151
  %vm2361 = vweird.f32 %v2354
  %vm2362 = vmor %vm2360, %vm2361
  %v2363 = vsel %vm2362, %v2354, %v2359
  %v2364 = vrsqrt.pop %v2152
  %v2365 = vmul.f32 %v2364, %v2152
  %v2366 = vmul.f32 %v2365, %v2364
  %v2367 = vmul.f32 0.5, %v2366
  %v2368 = vsub.f32 1.5, %v2367
  %v2369 = vmul.f32 %v2364, %v2368
  %vm2370 = vweird.f32 %v2152
  %vm2371 = vweird.f32 %v2364
  %vm2372 = vmor %vm2370, %vm2371
  %v2373 = vsel %vm2372, %v2364, %v2369
  %v2374 = vrsqrt.pop %v2153
  %v2375 = vmul.f32 %v2374, %v2153
  %v2376 = vmul.f32 %v2375, %v2374
  %v2377 = vmul.f32 0.5, %v2376
  %v2378 = vsub.f32 1.5, %v2377
  %v2379 = vmul.f32 %v2374, %v2378
  %vm2380 = vweird.f32 %v2153
  %vm2381 = vweird.f32 %v2374
  %vm2382 = vmor %vm2380, %vm2381
  %v2383 = vsel %vm2382, %v2374, %v2379
  %v2384 = vrsqrt.pop %v2154
  %v2385 = vmul.f32 %v2384, %v2154
  %v2386 = vmul.f32 %v2385, %v2384
  %v2387 = vmul.f32 0.5, %v2386
  %v2388 = vsub.f32 1.5, %v2387
  %v2389 = vmul.f32 %v2384, %v2388
  %vm2390 = vweird.f32 %v2154
  %vm2391 = vweird.f32 %v2384
  %vm2392 = vmor %vm2390, %vm2391
  %v2393 = vsel %vm2392, %v2384, %v2389
  %v2394 = vrsqrt.pop %v2155
  %v2395 = vmul.f32 %v2394, %v2155
  %v2396 = vmul.f32 %v2395, %v2394
  %v2397 = vmul.f32 0.5, %v2396
  %v2398 = vsub.f32 1.5, %v2397
  %v2399 = vmul.f32 %v2394, %v2398
  %vm2400 = vweird.f32 %v2155
  %vm2401 = vweird.f32 %v2394
  %vm2402 = vmor %vm2400, %vm2401
  %v2403 = vsel %vm2402, %v2394, %v2399
  %v2404 = vrsqrt.pop %v2156
  %v2405 = vmul.f32 %v2404, %v2156
  %v2406 = vmul.f32 %v2405, %v2404
  %v2407 = vmul.f32 0.5, %v2406
  %v2408 = vsub.f32 1.5, %v2407
  %v2409 = vmul.f32 %v2404, %v2408
  %vm2410 = vweird.f32 %v2156
  %vm2411 = vweird.f32 %v2404
  %vm2412 = vmor %vm2410, %vm2411
  %v2413 = vsel %vm2412, %v2404, %v2409
  %v2414 = vrsqrt.pop %v2157
  %v2415 = vmul.f32 %v2414, %v2157
  %v2416 = vmul.f32 %v2415, %v2414
  %v2417 = vmul.f32 0.5, %v2416
  %v2418 = vsub.f32 1.5, %v2417
  %v2419 = vmul.f32 %v2414, %v2418
  %vm2420 = vweird.f32 %v2157
  %vm2421 = vweird.f32 %v2414
  %vm2422 = vmor %vm2420, %vm2421
  %v2423 = vsel %vm2422, %v2414, %v2419
  %v2424 = vrsqrt.pop %v2158
  %v2425 = vmul.f32 %v2424, %v2158
  %v2426 = vmul.f32 %v2425, %v2424
  %v2427 = vmul.f32 0.5, %v2426
  %v2428 = vsub.f32 1.5, %v2427
  %v2429 = vmul.f32 %v2424, %v2428
  %vm2430 = vweird.f32 %v2158
  %vm2431 = vweird.f32 %v2424
  %vm2432 = vmor %vm2430, %vm2431
  %v2433 = vsel %vm2432, %v2424, %v2429
  %v2434 = vrsqrt.pop %v2159
  %v2435 = vmul.f32 %v2434, %v2159
  %v2436 = vmul.f32 %v2435, %v2434
  %v2437 = vmul.f32 0.5, %v2436
  %v2438 = vsub.f32 1.5, %v2437
  %v2439 = vmul.f32 %v2434, %v2438
  %vm2440 = vweird.f32 %v2159
  %vm2441 = vweird.f32 %v2434
  %vm2442 = vmor %vm2440, %vm2441
  %v2443 = vsel %vm2442, %v2434, %v2439
  %v2444 = vrsqrt.pop %v2160
  %v2445 = vmul.f32 %v2444, %v2160
  %v2446 = vmul.f32 %v2445, %v2444
  %v2447 = vmul.f32 0.5, %v2446
  %v2448 = vsub.f32 1.5, %v2447
  %v2449 = vmul.f32 %v2444, %v2448
  %vm2450 = vweird.f32 %v2160
  %vm2451 = vweird.f32 %v2444
  %vm2452 = vmor %vm2450, %vm2451
  %v2453 = vsel %vm2452, %v2444, %v2449
  %v2454 = vrsqrt.pop %v2161
  %v2455 = vmul.f32 %v2454, %v2161
  %v2456 = vmul.f32 %v2455, %v2454
  %v2457 = vmul.f32 0.5, %v2456
  %v2458 = vsub.f32 1.5, %v2457
  %v2459 = vmul.f32 %v2454, %v2458
  %vm2460 = vweird.f32 %v2161
  %vm2461 = vweird.f32 %v2454
  %vm2462 = vmor %vm2460, %vm2461
  %v2463 = vsel %vm2462, %v2454, %v2459
  %v2464 = vrsqrt.pop %v2162
  %v2465 = vmul.f32 %v2464, %v2162
  %v2466 = vmul.f32 %v2465, %v2464
  %v2467 = vmul.f32 0.5, %v2466
  %v2468 = vsub.f32 1.5, %v2467
  %v2469 = vmul.f32 %v2464, %v2468
  %vm2470 = vweird.f32 %v2162
  %vm2471 = vweird.f32 %v2464
  %vm2472 = vmor %vm2470, %vm2471
  %v2473 = vsel %vm2472, %v2464, %v2469
  %v2474 = vrsqrt.pop %v2163
  %v2475 = vmul.f32 %v2474, %v2163
  %v2476 = vmul.f32 %v2475, %v2474
  %v2477 = vmul.f32 0.5, %v2476
  %v2478 = vsub.f32 1.5, %v2477
  %v2479 = vmul.f32 %v2474, %v2478
  %vm2480 = vweird.f32 %v2163
  %vm2481 = vweird.f32 %v2474
  %vm2482 = vmor %vm2480, %vm2481
  %v2483 = vsel %vm2482, %v2474, %v2479
  %v2484 = vld [vmem:[%s2] sm:$0xff]
  %v2485 = vld [vmem:[%s2 + $0x8] sm:$0xff]
  %v2486 = vld [vmem:[%s2 + $0x10] sm:$0xff]
  %v2487 = vld [vmem:[%s2 + $0x18] sm:$0xff]
  %v2488 = vld [vmem:[%s2 + $0x20] sm:$0xff]
  %v2489 = vld [vmem:[%s2 + $0x28] sm:$0xff]
  %v2490 = vld [vmem:[%s2 + $0x30] sm:$0xff]
  %v2491 = vld [vmem:[%s2 + $0x38] sm:$0xff]
  %v2492 = vld [vmem:[%s2 + $0x40] sm:$0xff]
  %v2493 = vld [vmem:[%s2 + $0x48] sm:$0xff]
  %v2494 = vld [vmem:[%s2 + $0x50] sm:$0xff]
  %v2495 = vld [vmem:[%s2 + $0x58] sm:$0xff]
  %v2496 = vld [vmem:[%s2 + $0x60] sm:$0xff]
  %v2497 = vld [vmem:[%s2 + $0x68] sm:$0xff]
  %v2498 = vld [vmem:[%s2 + $0x70] sm:$0xff]
  %v2499 = vld [vmem:[%s2 + $0x78] sm:$0xff]
  %v2500 = vld [vmem:[%s2 + $0x80] sm:$0xff]
  %v2501 = vld [vmem:[%s2 + $0x88] sm:$0xff]
  %v2502 = vld [vmem:[%s2 + $0x90] sm:$0xff]
  %v2503 = vld [vmem:[%s2 + $0x98] sm:$0xff]
  %v2504 = vld [vmem:[%s2 + $0xa0] sm:$0xff]
  %v2505 = vld [vmem:[%s2 + $0xa8] sm:$0xff]
  %v2506 = vld [vmem:[%s2 + $0xb0] sm:$0xff]
  %v2507 = vld [vmem:[%s2 + $0xb8] sm:$0xff]
  %v2508 = vld [vmem:[%s2 + $0xc0] sm:$0xff]
  %v2509 = vld [vmem:[%s2 + $0xc8] sm:$0xff]
  %v2510 = vld [vmem:[%s2 + $0xd0] sm:$0xff]
  %v2511 = vld [vmem:[%s2 + $0xd8] sm:$0xff]
  %v2512 = vld [vmem:[%s2 + $0xe0] sm:$0xff]
  %v2513 = vld [vmem:[%s2 + $0xe8] sm:$0xff]
  %v2514 = vld [vmem:[%s2 + $0xf0] sm:$0xff]
  %v2515 = vld [vmem:[%s2 + $0xf8] sm:$0xff]
  %v2516 = vmul.f32 %v2173, %v2484
  %v2517 = vmul.f32 %v2183, %v2485
  %v2518 = vmul.f32 %v2193, %v2486
  %v2519 = vmul.f32 %v2203, %v2487
  %v2520 = vmul.f32 %v2213, %v2488
  %v2521 = vmul.f32 %v2223, %v2489
  %v2522 = vmul.f32 %v2233, %v2490
  %v2523 = vmul.f32 %v2243, %v2491
  %v2524 = vmul.f32 %v2253, %v2492
  %v2525 = vmul.f32 %v2263, %v2493
  %v2526 = vmul.f32 %v2273, %v2494
  %v2527 = vmul.f32 %v2283, %v2495
  %v2528 = vmul.f32 %v2293, %v2496
  %v2529 = vmul.f32 %v2303, %v2497
  %v2530 = vmul.f32 %v2313, %v2498
  %v2531 = vmul.f32 %v2323, %v2499
  %v2532 = vmul.f32 %v2333, %v2500
  %v2533 = vmul.f32 %v2343, %v2501
  %v2534 = vmul.f32 %v2353, %v2502
  %v2535 = vmul.f32 %v2363, %v2503
  %v2536 = vmul.f32 %v2373, %v2504
  %v2537 = vmul.f32 %v2383, %v2505
  %v2538 = vmul.f32 %v2393, %v2506
  %v2539 = vmul.f32 %v2403, %v2507
  %v2540 = vmul.f32 %v2413, %v2508
  %v2541 = vmul.f32 %v2423, %v2509
  %v2542 = vmul.f32 %v2433, %v2510
  %v2543 = vmul.f32 %v2443, %v2511
  %v2544 = vmul.f32 %v2453, %v2512
  %v2545 = vmul.f32 %v2463, %v2513
  %v2546 = vmul.f32 %v2473, %v2514
  %v2547 = vmul.f32 %v2483, %v2515
  %v2548 = vld [vmem:[%s3] sm:$0xff]
  %v2549 = vld [vmem:[%s3 + $0x8] sm:$0xff]
  %v2550 = vld [vmem:[%s3 + $0x10] sm:$0xff]
  %v2551 = vld [vmem:[%s3 + $0x18] sm:$0xff]
  %v2552 = vld [vmem:[%s3 + $0x20] sm:$0xff]
  %v2553 = vld [vmem:[%s3 + $0x28] sm:$0xff]
  %v2554 = vld [vmem:[%s3 + $0x30] sm:$0xff]
  %v2555 = vld [vmem:[%s3 + $0x38] sm:$0xff]
  %v2556 = vld [vmem:[%s3 + $0x40] sm:$0xff]
  %v2557 = vld [vmem:[%s3 + $0x48] sm:$0xff]
  %v2558 = vld [vmem:[%s3 + $0x50] sm:$0xff]
  %v2559 = vld [vmem:[%s3 + $0x58] sm:$0xff]
  %v2560 = vld [vmem:[%s3 + $0x60] sm:$0xff]
  %v2561 = vld [vmem:[%s3 + $0x68] sm:$0xff]
  %v2562 = vld [vmem:[%s3 + $0x70] sm:$0xff]
  %v2563 = vld [vmem:[%s3 + $0x78] sm:$0xff]
  %v2564 = vld [vmem:[%s3 + $0x80] sm:$0xff]
  %v2565 = vld [vmem:[%s3 + $0x88] sm:$0xff]
  %v2566 = vld [vmem:[%s3 + $0x90] sm:$0xff]
  %v2567 = vld [vmem:[%s3 + $0x98] sm:$0xff]
  %v2568 = vld [vmem:[%s3 + $0xa0] sm:$0xff]
  %v2569 = vld [vmem:[%s3 + $0xa8] sm:$0xff]
  %v2570 = vld [vmem:[%s3 + $0xb0] sm:$0xff]
  %v2571 = vld [vmem:[%s3 + $0xb8] sm:$0xff]
  %v2572 = vld [vmem:[%s3 + $0xc0] sm:$0xff]
  %v2573 = vld [vmem:[%s3 + $0xc8] sm:$0xff]
  %v2574 = vld [vmem:[%s3 + $0xd0] sm:$0xff]
  %v2575 = vld [vmem:[%s3 + $0xd8] sm:$0xff]
  %v2576 = vld [vmem:[%s3 + $0xe0] sm:$0xff]
  %v2577 = vld [vmem:[%s3 + $0xe8] sm:$0xff]
  %v2578 = vld [vmem:[%s3 + $0xf0] sm:$0xff]
  %v2579 = vld [vmem:[%s3 + $0xf8] sm:$0xff]
  %v2580 = vmul.f32 %v1780, %v2516
  %v2581 = vmul.f32 %v1781, %v2517
  %v2582 = vmul.f32 %v1782, %v2518
  %v2583 = vmul.f32 %v1783, %v2519
  %v2584 = vmul.f32 %v1784, %v2520
  %v2585 = vmul.f32 %v1785, %v2521
  %v2586 = vmul.f32 %v1786, %v2522
  %v2587 = vmul.f32 %v1787, %v2523
  %v2588 = vmul.f32 %v1788, %v2524
  %v2589 = vmul.f32 %v1789, %v2525
  %v2590 = vmul.f32 %v1790, %v2526
  %v2591 = vmul.f32 %v1791, %v2527
  %v2592 = vmul.f32 %v1792, %v2528
  %v2593 = vmul.f32 %v1793, %v2529
  %v2594 = vmul.f32 %v1794, %v2530
  %v2595 = vmul.f32 %v1795, %v2531
  %v2596 = vmul.f32 %v1796, %v2532
  %v2597 = vmul.f32 %v1797, %v2533
  %v2598 = vmul.f32 %v1798, %v2534
  %v2599 = vmul.f32 %v1799, %v2535
  %v2600 = vmul.f32 %v1800, %v2536
  %v2601 = vmul.f32 %v1801, %v2537
  %v2602 = vmul.f32 %v1802, %v2538
  %v2603 = vmul.f32 %v1803, %v2539
  %v2604 = vmul.f32 %v1804, %v2540
  %v2605 = vmul.f32 %v1805, %v2541
  %v2606 = vmul.f32 %v1806, %v2542
  %v2607 = vmul.f32 %v1807, %v2543
  %v2608 = vmul.f32 %v1808, %v2544
  %v2609 = vmul.f32 %v1809, %v2545
  %v2610 = vmul.f32 %v1810, %v2546
  %v2611 = vmul.f32 %v1811, %v2547
  %v2612 = vsub.f32 %v2548, %v2580
  %v2613 = vsub.f32 %v2549, %v2581
  %v2614 = vsub.f32 %v2550, %v2582
  %v2615 = vsub.f32 %v2551, %v2583
  %v2616 = vsub.f32 %v2552, %v2584
  %v2617 = vsub.f32 %v2553, %v2585
  %v2618 = vsub.f32 %v2554, %v2586
  %v2619 = vsub.f32 %v2555, %v2587
  %v2620 = vsub.f32 %v2556, %v2588
  %v2621 = vsub.f32 %v2557, %v2589
  %v2622 = vsub.f32 %v2558, %v2590
  %v2623 = vsub.f32 %v2559, %v2591
  %v2624 = vsub.f32 %v2560, %v2592
  %v2625 = vsub.f32 %v2561, %v2593
  %v2626 = vsub.f32 %v2562, %v2594
  %v2627 = vsub.f32 %v2563, %v2595
  %v2628 = vsub.f32 %v2564, %v2596
  %v2629 = vsub.f32 %v2565, %v2597
  %v2630 = vsub.f32 %v2566, %v2598
  %v2631 = vsub.f32 %v2567, %v2599
  %v2632 = vsub.f32 %v2568, %v2600
  %v2633 = vsub.f32 %v2569, %v2601
  %v2634 = vsub.f32 %v2570, %v2602
  %v2635 = vsub.f32 %v2571, %v2603
  %v2636 = vsub.f32 %v2572, %v2604
  %v2637 = vsub.f32 %v2573, %v2605
  %v2638 = vsub.f32 %v2574, %v2606
  %v2639 = vsub.f32 %v2575, %v2607
  %v2640 = vsub.f32 %v2576, %v2608
  %v2641 = vsub.f32 %v2577, %v2609
  %v2642 = vsub.f32 %v2578, %v2610
  %v2643 = vsub.f32 %v2579, %v2611
  %2645 = vset.pattern.permute.xlu0 0
  %2646 = vperm.xlu0 %2645, %v2516
  %v2647 = vpop.permute.xlu0 %2646
  %2650 = vset.pattern.permute.xlu0 0
  %2651 = vperm.xlu0 %2650, %v2517
  %v2652 = vpop.permute.xlu0 %2651
  %2655 = vset.pattern.permute.xlu0 0
  %2656 = vperm.xlu0 %2655, %v2518
  %v2657 = vpop.permute.xlu0 %2656
  %2660 = vset.pattern.permute.xlu0 0
  %2661 = vperm.xlu0 %2660, %v2519
  %v2662 = vpop.permute.xlu0 %2661
  %2665 = vset.pattern.permute.xlu0 0
  %2666 = vperm.xlu0 %2665, %v2520
  %v2667 = vpop.permute.xlu0 %2666
  %2670 = vset.pattern.permute.xlu0 0
  %2671 = vperm.xlu0 %2670, %v2521
  %v2672 = vpop.permute.xlu0 %2671
  %2675 = vset.pattern.permute.xlu0 0
  %2676 = vperm.xlu0 %2675, %v2522
  %v2677 = vpop.permute.xlu0 %2676
  %2680 = vset.pattern.permute.xlu0 0
  %2681 = vperm.xlu0 %2680, %v2523
  %v2682 = vpop.permute.xlu0 %2681
  %2685 = vset.pattern.permute.xlu0 0
  %2686 = vperm.xlu0 %2685, %v2524
  %v2687 = vpop.permute.xlu0 %2686
  %2690 = vset.pattern.permute.xlu0 0
  %2691 = vperm.xlu0 %2690, %v2525
  %v2692 = vpop.permute.xlu0 %2691
  %2695 = vset.pattern.permute.xlu0 0
  %2696 = vperm.xlu0 %2695, %v2526
  %v2697 = vpop.permute.xlu0 %2696
  %2700 = vset.pattern.permute.xlu0 0
  %2701 = vperm.xlu0 %2700, %v2527
  %v2702 = vpop.permute.xlu0 %2701
  %2705 = vset.pattern.permute.xlu0 0
  %2706 = vperm.xlu0 %2705, %v2528
  %v2707 = vpop.permute.xlu0 %2706
  %2710 = vset.pattern.permute.xlu0 0
  %2711 = vperm.xlu0 %2710, %v2529
  %v2712 = vpop.permute.xlu0 %2711
  %2715 = vset.pattern.permute.xlu0 0
  %2716 = vperm.xlu0 %2715, %v2530
  %v2717 = vpop.permute.xlu0 %2716
  %2720 = vset.pattern.permute.xlu0 0
  %2721 = vperm.xlu0 %2720, %v2531
  %v2722 = vpop.permute.xlu0 %2721
  %2725 = vset.pattern.permute.xlu0 0
  %2726 = vperm.xlu0 %2725, %v2532
  %v2727 = vpop.permute.xlu0 %2726
  %2730 = vset.pattern.permute.xlu0 0
  %2731 = vperm.xlu0 %2730, %v2533
  %v2732 = vpop.permute.xlu0 %2731
  %2735 = vset.pattern.permute.xlu0 0
  %2736 = vperm.xlu0 %2735, %v2534
  %v2737 = vpop.permute.xlu0 %2736
  %2740 = vset.pattern.permute.xlu0 0
  %2741 = vperm.xlu0 %2740, %v2535
  %v2742 = vpop.permute.xlu0 %2741
  %2745 = vset.pattern.permute.xlu0 0
  %2746 = vperm.xlu0 %2745, %v2536
  %v2747 = vpop.permute.xlu0 %2746
  %2750 = vset.pattern.permute.xlu0 0
  %2751 = vperm.xlu0 %2750, %v2537
  %v2752 = vpop.permute.xlu0 %2751
  %2755 = vset.pattern.permute.xlu0 0
  %2756 = vperm.xlu0 %2755, %v2538
  %v2757 = vpop.permute.xlu0 %2756
  %2760 = vset.pattern.permute.xlu0 0
  %2761 = vperm.xlu0 %2760, %v2539
  %v2762 = vpop.permute.xlu0 %2761
  %2765 = vset.pattern.permute.xlu0 0
  %2766 = vperm.xlu0 %2765, %v2540
  %v2767 = vpop.permute.xlu0 %2766
  %2770 = vset.pattern.permute.xlu0 0
  %2771 = vperm.xlu0 %2770, %v2541
  %v2772 = vpop.permute.xlu0 %2771
  %2775 = vset.pattern.permute.xlu0 0
  %2776 = vperm.xlu0 %2775, %v2542
  %v2777 = vpop.permute.xlu0 %2776
  %2780 = vset.pattern.permute.xlu0 0
  %2781 = vperm.xlu0 %2780, %v2543
  %v2782 = vpop.permute.xlu0 %2781
  %2785 = vset.pattern.permute.xlu0 0
  %2786 = vperm.xlu0 %2785, %v2544
  %v2787 = vpop.permute.xlu0 %2786
  %2790 = vset.pattern.permute.xlu0 0
  %2791 = vperm.xlu0 %2790, %v2545
  %v2792 = vpop.permute.xlu0 %2791
  %2795 = vset.pattern.permute.xlu0 0
  %2796 = vperm.xlu0 %2795, %v2546
  %v2797 = vpop.permute.xlu0 %2796
  %2800 = vset.pattern.permute.xlu0 0
  %2801 = vperm.xlu0 %2800, %v2547
  %v2802 = vpop.permute.xlu0 %2801
  %v2804 = vmul.f32 %v1127, %v2647
  %v2805 = vmul.f32 %v1572, %v2647
  %v2806 = vmul.f32 %v1129, %v2652
  %v2807 = vmul.f32 %v1574, %v2652
  %v2808 = vmul.f32 %v1132, %v2657
  %v2809 = vmul.f32 %v1577, %v2657
  %v2810 = vmul.f32 %v1134, %v2662
  %v2811 = vmul.f32 %v1579, %v2662
  %v2812 = vmul.f32 %v1137, %v2667
  %v2813 = vmul.f32 %v1582, %v2667
  %v2814 = vmul.f32 %v1139, %v2672
  %v2815 = vmul.f32 %v1584, %v2672
  %v2816 = vmul.f32 %v1142, %v2677
  %v2817 = vmul.f32 %v1587, %v2677
  %v2818 = vmul.f32 %v1144, %v2682
  %v2819 = vmul.f32 %v1589, %v2682
  %v2820 = vmul.f32 %v1147, %v2687
  %v2821 = vmul.f32 %v1592, %v2687
  %v2822 = vmul.f32 %v1149, %v2692
  %v2823 = vmul.f32 %v1594, %v2692
  %v2824 = vmul.f32 %v1152, %v2697
  %v2825 = vmul.f32 %v1597, %v2697
  %v2826 = vmul.f32 %v1154, %v2702
  %v2827 = vmul.f32 %v1599, %v2702
  %v2828 = vmul.f32 %v1157, %v2707
  %v2829 = vmul.f32 %v1602, %v2707
  %v2830 = vmul.f32 %v1159, %v2712
  %v2831 = vmul.f32 %v1604, %v2712
  %v2832 = vmul.f32 %v1162, %v2717
  %v2833 = vmul.f32 %v1607, %v2717
  %v2834 = vmul.f32 %v1164, %v2722
  %v2835 = vmul.f32 %v1609, %v2722
  %v2836 = vmul.f32 %v1167, %v2727
  %v2837 = vmul.f32 %v1612, %v2727
  %v2838 = vmul.f32 %v1169, %v2732
  %v2839 = vmul.f32 %v1614, %v2732
  %v2840 = vmul.f32 %v1172, %v2737
  %v2841 = vmul.f32 %v1617, %v2737
  %v2842 = vmul.f32 %v1174, %v2742
  %v2843 = vmul.f32 %v1619, %v2742
  %v2844 = vmul.f32 %v1177, %v2747
  %v2845 = vmul.f32 %v1622, %v2747
  %v2846 = vmul.f32 %v1179, %v2752
  %v2847 = vmul.f32 %v1624, %v2752
  %v2848 = vmul.f32 %v1182, %v2757
  %v2849 = vmul.f32 %v1627, %v2757
  %v2850 = vmul.f32 %v1184, %v2762
  %v2851 = vmul.f32 %v1629, %v2762
  %v2852 = vmul.f32 %v1187, %v2767
  %v2853 = vmul.f32 %v1632, %v2767
  %v2854 = vmul.f32 %v1189, %v2772
  %v2855 = vmul.f32 %v1634, %v2772
  %v2856 = vmul.f32 %v1192, %v2777
  %v2857 = vmul.f32 %v1637, %v2777
  %v2858 = vmul.f32 %v1194, %v2782
  %v2859 = vmul.f32 %v1639, %v2782
  %v2860 = vmul.f32 %v1197, %v2787
  %v2861 = vmul.f32 %v1642, %v2787
  %v2862 = vmul.f32 %v1199, %v2792
  %v2863 = vmul.f32 %v1644, %v2792
  %v2864 = vmul.f32 %v1202, %v2797
  %v2865 = vmul.f32 %v1647, %v2797
  %v2866 = vmul.f32 %v1204, %v2802
  %v2867 = vmul.f32 %v1649, %v2802
  %2869 = vset.pattern.permute.xlu0 0
  %2870 = vperm.xlu0 %2869, %v2612
  %v2871 = vpop.permute.xlu0 %2870
  %2874 = vset.pattern.permute.xlu0 0
  %2875 = vperm.xlu0 %2874, %v2613
  %v2876 = vpop.permute.xlu0 %2875
  %2879 = vset.pattern.permute.xlu0 0
  %2880 = vperm.xlu0 %2879, %v2614
  %v2881 = vpop.permute.xlu0 %2880
  %2884 = vset.pattern.permute.xlu0 0
  %2885 = vperm.xlu0 %2884, %v2615
  %v2886 = vpop.permute.xlu0 %2885
  %2889 = vset.pattern.permute.xlu0 0
  %2890 = vperm.xlu0 %2889, %v2616
  %v2891 = vpop.permute.xlu0 %2890
  %2894 = vset.pattern.permute.xlu0 0
  %2895 = vperm.xlu0 %2894, %v2617
  %v2896 = vpop.permute.xlu0 %2895
  %2899 = vset.pattern.permute.xlu0 0
  %2900 = vperm.xlu0 %2899, %v2618
  %v2901 = vpop.permute.xlu0 %2900
  %2904 = vset.pattern.permute.xlu0 0
  %2905 = vperm.xlu0 %2904, %v2619
  %v2906 = vpop.permute.xlu0 %2905
  %2909 = vset.pattern.permute.xlu0 0
  %2910 = vperm.xlu0 %2909, %v2620
  %v2911 = vpop.permute.xlu0 %2910
  %2914 = vset.pattern.permute.xlu0 0
  %2915 = vperm.xlu0 %2914, %v2621
  %v2916 = vpop.permute.xlu0 %2915
  %2919 = vset.pattern.permute.xlu0 0
  %2920 = vperm.xlu0 %2919, %v2622
  %v2921 = vpop.permute.xlu0 %2920
  %2924 = vset.pattern.permute.xlu0 0
  %2925 = vperm.xlu0 %2924, %v2623
  %v2926 = vpop.permute.xlu0 %2925
  %2929 = vset.pattern.permute.xlu0 0
  %2930 = vperm.xlu0 %2929, %v2624
  %v2931 = vpop.permute.xlu0 %2930
  %2934 = vset.pattern.permute.xlu0 0
  %2935 = vperm.xlu0 %2934, %v2625
  %v2936 = vpop.permute.xlu0 %2935
  %2939 = vset.pattern.permute.xlu0 0
  %2940 = vperm.xlu0 %2939, %v2626
  %v2941 = vpop.permute.xlu0 %2940
  %2944 = vset.pattern.permute.xlu0 0
  %2945 = vperm.xlu0 %2944, %v2627
  %v2946 = vpop.permute.xlu0 %2945
  %2949 = vset.pattern.permute.xlu0 0
  %2950 = vperm.xlu0 %2949, %v2628
  %v2951 = vpop.permute.xlu0 %2950
  %2954 = vset.pattern.permute.xlu0 0
  %2955 = vperm.xlu0 %2954, %v2629
  %v2956 = vpop.permute.xlu0 %2955
  %2959 = vset.pattern.permute.xlu0 0
  %2960 = vperm.xlu0 %2959, %v2630
  %v2961 = vpop.permute.xlu0 %2960
  %2964 = vset.pattern.permute.xlu0 0
  %2965 = vperm.xlu0 %2964, %v2631
  %v2966 = vpop.permute.xlu0 %2965
  %2969 = vset.pattern.permute.xlu0 0
  %2970 = vperm.xlu0 %2969, %v2632
  %v2971 = vpop.permute.xlu0 %2970
  %2974 = vset.pattern.permute.xlu0 0
  %2975 = vperm.xlu0 %2974, %v2633
  %v2976 = vpop.permute.xlu0 %2975
  %2979 = vset.pattern.permute.xlu0 0
  %2980 = vperm.xlu0 %2979, %v2634
  %v2981 = vpop.permute.xlu0 %2980
  %2984 = vset.pattern.permute.xlu0 0
  %2985 = vperm.xlu0 %2984, %v2635
  %v2986 = vpop.permute.xlu0 %2985
  %2989 = vset.pattern.permute.xlu0 0
  %2990 = vperm.xlu0 %2989, %v2636
  %v2991 = vpop.permute.xlu0 %2990
  %2994 = vset.pattern.permute.xlu0 0
  %2995 = vperm.xlu0 %2994, %v2637
  %v2996 = vpop.permute.xlu0 %2995
  %2999 = vset.pattern.permute.xlu0 0
  %3000 = vperm.xlu0 %2999, %v2638
  %v3001 = vpop.permute.xlu0 %3000
  %3004 = vset.pattern.permute.xlu0 0
  %3005 = vperm.xlu0 %3004, %v2639
  %v3006 = vpop.permute.xlu0 %3005
  %3009 = vset.pattern.permute.xlu0 0
  %3010 = vperm.xlu0 %3009, %v2640
  %v3011 = vpop.permute.xlu0 %3010
  %3014 = vset.pattern.permute.xlu0 0
  %3015 = vperm.xlu0 %3014, %v2641
  %v3016 = vpop.permute.xlu0 %3015
  %3019 = vset.pattern.permute.xlu0 0
  %3020 = vperm.xlu0 %3019, %v2642
  %v3021 = vpop.permute.xlu0 %3020
  %3024 = vset.pattern.permute.xlu0 0
  %3025 = vperm.xlu0 %3024, %v2643
  %v3026 = vpop.permute.xlu0 %3025
  %v3028 = vadd.f32 %v2804, %v2871
  %v3029 = vadd.f32 %v2805, %v2871
  %v3030 = vadd.f32 %v2806, %v2876
  %v3031 = vadd.f32 %v2807, %v2876
  %v3032 = vadd.f32 %v2808, %v2881
  %v3033 = vadd.f32 %v2809, %v2881
  %v3034 = vadd.f32 %v2810, %v2886
  %v3035 = vadd.f32 %v2811, %v2886
  %v3036 = vadd.f32 %v2812, %v2891
  %v3037 = vadd.f32 %v2813, %v2891
  %v3038 = vadd.f32 %v2814, %v2896
  %v3039 = vadd.f32 %v2815, %v2896
  %v3040 = vadd.f32 %v2816, %v2901
  %v3041 = vadd.f32 %v2817, %v2901
  %v3042 = vadd.f32 %v2818, %v2906
  %v3043 = vadd.f32 %v2819, %v2906
  %v3044 = vadd.f32 %v2820, %v2911
  %v3045 = vadd.f32 %v2821, %v2911
  %v3046 = vadd.f32 %v2822, %v2916
  %v3047 = vadd.f32 %v2823, %v2916
  %v3048 = vadd.f32 %v2824, %v2921
  %v3049 = vadd.f32 %v2825, %v2921
  %v3050 = vadd.f32 %v2826, %v2926
  %v3051 = vadd.f32 %v2827, %v2926
  %v3052 = vadd.f32 %v2828, %v2931
  %v3053 = vadd.f32 %v2829, %v2931
  %v3054 = vadd.f32 %v2830, %v2936
  %v3055 = vadd.f32 %v2831, %v2936
  %v3056 = vadd.f32 %v2832, %v2941
  %v3057 = vadd.f32 %v2833, %v2941
  %v3058 = vadd.f32 %v2834, %v2946
  %v3059 = vadd.f32 %v2835, %v2946
  %v3060 = vadd.f32 %v2836, %v2951
  %v3061 = vadd.f32 %v2837, %v2951
  %v3062 = vadd.f32 %v2838, %v2956
  %v3063 = vadd.f32 %v2839, %v2956
  %v3064 = vadd.f32 %v2840, %v2961
  %v3065 = vadd.f32 %v2841, %v2961
  %v3066 = vadd.f32 %v2842, %v2966
  %v3067 = vadd.f32 %v2843, %v2966
  %v3068 = vadd.f32 %v2844, %v2971
  %v3069 = vadd.f32 %v2845, %v2971
  %v3070 = vadd.f32 %v2846, %v2976
  %v3071 = vadd.f32 %v2847, %v2976
  %v3072 = vadd.f32 %v2848, %v2981
  %v3073 = vadd.f32 %v2849, %v2981
  %v3074 = vadd.f32 %v2850, %v2986
  %v3075 = vadd.f32 %v2851, %v2986
  %v3076 = vadd.f32 %v2852, %v2991
  %v3077 = vadd.f32 %v2853, %v2991
  %v3078 = vadd.f32 %v2854, %v2996
  %v3079 = vadd.f32 %v2855, %v2996
  %v3080 = vadd.f32 %v2856, %v3001
  %v3081 = vadd.f32 %v2857, %v3001
  %v3082 = vadd.f32 %v2858, %v3006
  %v3083 = vadd.f32 %v2859, %v3006
  %v3084 = vadd.f32 %v2860, %v3011
  %v3085 = vadd.f32 %v2861, %v3011
  %v3086 = vadd.f32 %v2862, %v3016
  %v3087 = vadd.f32 %v2863, %v3016
  %v3088 = vadd.f32 %v2864, %v3021
  %v3089 = vadd.f32 %v2865, %v3021
  %v3090 = vadd.f32 %v2866, %v3026
  %v3091 = vadd.f32 %v2867, %v3026
  %v3092 = vmax.f32 %v3028, 0.0
  %v3093 = vmax.f32 %v3029, 0.0
  %v3094 = vmax.f32 %v3030, 0.0
  %v3095 = vmax.f32 %v3031, 0.0
  %v3096 = vmax.f32 %v3032, 0.0
  %v3097 = vmax.f32 %v3033, 0.0
  %v3098 = vmax.f32 %v3034, 0.0
  %v3099 = vmax.f32 %v3035, 0.0
  %v3100 = vmax.f32 %v3036, 0.0
  %v3101 = vmax.f32 %v3037, 0.0
  %v3102 = vmax.f32 %v3038, 0.0
  %v3103 = vmax.f32 %v3039, 0.0
  %v3104 = vmax.f32 %v3040, 0.0
  %v3105 = vmax.f32 %v3041, 0.0
  %v3106 = vmax.f32 %v3042, 0.0
  %v3107 = vmax.f32 %v3043, 0.0
  %v3108 = vmax.f32 %v3044, 0.0
  %v3109 = vmax.f32 %v3045, 0.0
  %v3110 = vmax.f32 %v3046, 0.0
  %v3111 = vmax.f32 %v3047, 0.0
  %v3112 = vmax.f32 %v3048, 0.0
  %v3113 = vmax.f32 %v3049, 0.0
  %v3114 = vmax.f32 %v3050, 0.0
  %v3115 = vmax.f32 %v3051, 0.0
  %v3116 = vmax.f32 %v3052, 0.0
  %v3117 = vmax.f32 %v3053, 0.0
  %v3118 = vmax.f32 %v3054, 0.0
  %v3119 = vmax.f32 %v3055, 0.0
  %v3120 = vmax.f32 %v3056, 0.0
  %v3121 = vmax.f32 %v3057, 0.0
  %v3122 = vmax.f32 %v3058, 0.0
  %v3123 = vmax.f32 %v3059, 0.0
  %v3124 = vmax.f32 %v3060, 0.0
  %v3125 = vmax.f32 %v3061, 0.0
  %v3126 = vmax.f32 %v3062, 0.0
  %v3127 = vmax.f32 %v3063, 0.0
  %v3128 = vmax.f32 %v3064, 0.0
  %v3129 = vmax.f32 %v3065, 0.0
  %v3130 = vmax.f32 %v3066, 0.0
  %v3131 = vmax.f32 %v3067, 0.0
  %v3132 = vmax.f32 %v3068, 0.0
  %v3133 = vmax.f32 %v3069, 0.0
  %v3134 = vmax.f32 %v3070, 0.0
  %v3135 = vmax.f32 %v3071, 0.0
  %v3136 = vmax.f32 %v3072, 0.0
  %v3137 = vmax.f32 %v3073, 0.0
  %v3138 = vmax.f32 %v3074, 0.0
  %v3139 = vmax.f32 %v3075, 0.0
  %v3140 = vmax.f32 %v3076, 0.0
  %v3141 = vmax.f32 %v3077, 0.0
  %v3142 = vmax.f32 %v3078, 0.0
  %v3143 = vmax.f32 %v3079, 0.0
  %v3144 = vmax.f32 %v3080, 0.0
  %v3145 = vmax.f32 %v3081, 0.0
  %v3146 = vmax.f32 %v3082, 0.0
  %v3147 = vmax.f32 %v3083, 0.0
  %v3148 = vmax.f32 %v3084, 0.0
  %v3149 = vmax.f32 %v3085, 0.0
  %v3150 = vmax.f32 %v3086, 0.0
  %v3151 = vmax.f32 %v3087, 0.0
  %v3152 = vmax.f32 %v3088, 0.0
  %v3153 = vmax.f32 %v3089, 0.0
  %v3154 = vmax.f32 %v3090, 0.0
  %v3155 = vmax.f32 %v3091, 0.0
  %3156 = vst [vmem:[%s4] sm:$0xff] %v3092
  %3157 = vst.msk [vmem:[%s4 + $0x8] sm:$0xff] %vm1651, %v3093
  %3158 = vst [vmem:[%s4 + $0x10] sm:$0xff] %v3094
  %3159 = vst.msk [vmem:[%s4 + $0x18] sm:$0xff] %vm1651, %v3095
  %3160 = vst [vmem:[%s4 + $0x20] sm:$0xff] %v3096
  %3161 = vst.msk [vmem:[%s4 + $0x28] sm:$0xff] %vm1651, %v3097
  %3162 = vst [vmem:[%s4 + $0x30] sm:$0xff] %v3098
  %3163 = vst.msk [vmem:[%s4 + $0x38] sm:$0xff] %vm1651, %v3099
  %3164 = vst [vmem:[%s4 + $0x40] sm:$0xff] %v3100
  %3165 = vst.msk [vmem:[%s4 + $0x48] sm:$0xff] %vm1651, %v3101
  %3166 = vst [vmem:[%s4 + $0x50] sm:$0xff] %v3102
  %3167 = vst.msk [vmem:[%s4 + $0x58] sm:$0xff] %vm1651, %v3103
  %3168 = vst [vmem:[%s4 + $0x60] sm:$0xff] %v3104
  %3169 = vst.msk [vmem:[%s4 + $0x68] sm:$0xff] %vm1651, %v3105
  %3170 = vst [vmem:[%s4 + $0x70] sm:$0xff] %v3106
  %3171 = vst.msk [vmem:[%s4 + $0x78] sm:$0xff] %vm1651, %v3107
  %3172 = vst [vmem:[%s4 + $0x80] sm:$0xff] %v3108
  %3173 = vst.msk [vmem:[%s4 + $0x88] sm:$0xff] %vm1651, %v3109
  %3174 = vst [vmem:[%s4 + $0x90] sm:$0xff] %v3110
  %3175 = vst.msk [vmem:[%s4 + $0x98] sm:$0xff] %vm1651, %v3111
  %3176 = vst [vmem:[%s4 + $0xa0] sm:$0xff] %v3112
  %3177 = vst.msk [vmem:[%s4 + $0xa8] sm:$0xff] %vm1651, %v3113
  %3178 = vst [vmem:[%s4 + $0xb0] sm:$0xff] %v3114
  %3179 = vst.msk [vmem:[%s4 + $0xb8] sm:$0xff] %vm1651, %v3115
  %3180 = vst [vmem:[%s4 + $0xc0] sm:$0xff] %v3116
  %3181 = vst.msk [vmem:[%s4 + $0xc8] sm:$0xff] %vm1651, %v3117
  %3182 = vst [vmem:[%s4 + $0xd0] sm:$0xff] %v3118
  %3183 = vst.msk [vmem:[%s4 + $0xd8] sm:$0xff] %vm1651, %v3119
  %3184 = vst [vmem:[%s4 + $0xe0] sm:$0xff] %v3120
  %3185 = vst.msk [vmem:[%s4 + $0xe8] sm:$0xff] %vm1651, %v3121
  %3186 = vst [vmem:[%s4 + $0xf0] sm:$0xff] %v3122
  %3187 = vst.msk [vmem:[%s4 + $0xf8] sm:$0xff] %vm1651, %v3123
  %3188 = vst [vmem:[%s4 + $0x100] sm:$0xff] %v3124
  %3189 = vst.msk [vmem:[%s4 + $0x108] sm:$0xff] %vm1651, %v3125
  %3190 = vst [vmem:[%s4 + $0x110] sm:$0xff] %v3126
  %3191 = vst.msk [vmem:[%s4 + $0x118] sm:$0xff] %vm1651, %v3127
  %3192 = vst [vmem:[%s4 + $0x120] sm:$0xff] %v3128
  %3193 = vst.msk [vmem:[%s4 + $0x128] sm:$0xff] %vm1651, %v3129
  %3194 = vst [vmem:[%s4 + $0x130] sm:$0xff] %v3130
  %3195 = vst.msk [vmem:[%s4 + $0x138] sm:$0xff] %vm1651, %v3131
  %3196 = vst [vmem:[%s4 + $0x140] sm:$0xff] %v3132
  %3197 = vst.msk [vmem:[%s4 + $0x148] sm:$0xff] %vm1651, %v3133
  %3198 = vst [vmem:[%s4 + $0x150] sm:$0xff] %v3134
  %3199 = vst.msk [vmem:[%s4 + $0x158] sm:$0xff] %vm1651, %v3135
  %3200 = vst [vmem:[%s4 + $0x160] sm:$0xff] %v3136
  %3201 = vst.msk [vmem:[%s4 + $0x168] sm:$0xff] %vm1651, %v3137
  %3202 = vst [vmem:[%s4 + $0x170] sm:$0xff] %v3138
  %3203 = vst.msk [vmem:[%s4 + $0x178] sm:$0xff] %vm1651, %v3139
  %3204 = vst [vmem:[%s4 + $0x180] sm:$0xff] %v3140
  %3205 = vst.msk [vmem:[%s4 + $0x188] sm:$0xff] %vm1651, %v3141
  %3206 = vst [vmem:[%s4 + $0x190] sm:$0xff] %v3142
  %3207 = vst.msk [vmem:[%s4 + $0x198] sm:$0xff] %vm1651, %v3143
  %3208 = vst [vmem:[%s4 + $0x1a0] sm:$0xff] %v3144
  %3209 = vst.msk [vmem:[%s4 + $0x1a8] sm:$0xff] %vm1651, %v3145
  %3210 = vst [vmem:[%s4 + $0x1b0] sm:$0xff] %v3146
  %3211 = vst.msk [vmem:[%s4 + $0x1b8] sm:$0xff] %vm1651, %v3147
  %3212 = vst [vmem:[%s4 + $0x1c0] sm:$0xff] %v3148
  %3213 = vst.msk [vmem:[%s4 + $0x1c8] sm:$0xff] %vm1651, %v3149
  %3214 = vst [vmem:[%s4 + $0x1d0] sm:$0xff] %v3150
  %3215 = vst.msk [vmem:[%s4 + $0x1d8] sm:$0xff] %vm1651, %v3151
  %3216 = vst [vmem:[%s4 + $0x1e0] sm:$0xff] %v3152
  %3217 = vst.msk [vmem:[%s4 + $0x1e8] sm:$0xff] %vm1651, %v3153
  %3218 = vst [vmem:[%s4 + $0x1f0] sm:$0xff] %v3154
  %3219 = vst.msk [vmem:[%s4 + $0x1f8] sm:$0xff] %vm1651, %v3155
  // Predicated region
  $region18: #{tpu_custom_call.1} parent=0 // pred_check
    _
  $region19: #{tpu_custom_call.1} parent=0 // pred_check_branch
    %3221 = sbr.rel (0) target = $region21
  $region20: #{tpu_custom_call.1} parent=0 // pred_region
    _
  $region21: #{tpu_custom_call.1} parent=0 // pred_fallthru
    _
  // Predicated region
  $region22: #{tpu_custom_call.1} parent=0 // pred_check
    _
  $region23: #{tpu_custom_call.1} parent=0 // pred_check_branch
    %3223 = sbr.rel (0) target = $region25
  $region24: #{tpu_custom_call.1} parent=0 // pred_region
    _
  $region25: #{tpu_custom_call.1} parent=0 // pred_fallthru
    _

</llo_original>
